<compile_context>
chip_gen: v6e
topology: v6e:2x2x1
jax: 0.10.0
libtpu: 0.0.40
codegen_flags: <defaults>
</compile_context>

<pallas_src>
import functools
import math

import jax
import jax.numpy as jnp
import numpy as np
from jax.experimental import pallas as pl
from jax.experimental.pallas import tpu as pltpu


# ----------------------------------------------------------------------------
# Synthetic config (small shapes, consistent with the module's forward)
# ----------------------------------------------------------------------------
class Config:
    n = 16                    # number of graph nodes
    in_dim = 8                # GRU input size
    out_dim = 16              # GRU hidden size
    head_num = 2              # attention heads
    walk_len = 4              # window length fed to the GRU
    long_walk_len = 6         # random-walk length
    long_walks_per_node = 2   # walks started per node
    dropout = 0.0             # stored but unused in forward (as in torch module)

    @property
    def num_windows(self):
        return 1 + self.long_walk_len + 1 - self.walk_len

    @property
    def walks_per_node(self):
        return self.long_walks_per_node * self.num_windows


# ----------------------------------------------------------------------------
# Glue: random-walk / path generation (plain JAX)
# ----------------------------------------------------------------------------
def generate_random_walk(neighbors, config, key):
    """Mirrors generate_random_walk() from random_model.py.

    # TODO(synk): torch_cluster.random_walk is a node2vec p/q-biased sampler with no
    # Pallas equivalent; replaced here by a deterministic (seeded) uniform random walk.
    """
    n = config.n
    L = config.long_walk_len
    wpn = config.long_walks_per_node
    deg = neighbors.shape[1]

    batch = jnp.tile(jnp.arange(n, dtype=jnp.int32), wpn)  # torch.arange(n).repeat(wpn)
    cur = batch
    rw = [cur]
    for _ in range(L):
        key, sub = jax.random.split(key)
        choice = jax.random.randint(sub, (cur.shape[0],), 0, deg)
        cur = neighbors[cur, choice]
        rw.append(cur)
    rw = jnp.stack(rw, axis=1)                              # (n*wpn, L+1)

    walks = [rw[:, j:j + config.walk_len] for j in range(config.num_windows)]
    out_walks = jnp.concatenate(walks, axis=0)              # (P, walk_len)
    out_walks = out_walks[:, ::-1]                          # reversed columns
    return out_walks


# ----------------------------------------------------------------------------
# Parameter packing (done ONCE at init, not per call)
# ----------------------------------------------------------------------------
def pack_params(params, config):
    D, F, H = config.out_dim, config.in_dim, config.head_num
    a_t_pad = jnp.zeros((3 * D, D), jnp.float32).at[:H, :].set(params["a"].T)
    slab = jnp.concatenate(
        [
            params["w_ih"].astype(jnp.float32),        # (3D, F)
            params["w_hh"].astype(jnp.float32),        # (3D, D)
            params["b_ih"][:, None].astype(jnp.float32),  # (3D, 1)
            params["b_hh"][:, None].astype(jnp.float32),  # (3D, 1)
            a_t_pad,                                    # (3D, D), rows 0:H = a^T
        ],
        axis=1,
    )                                                   # (3D, F + D + 2 + D)
    return slab


# ----------------------------------------------------------------------------
# Fused kernel: gather + feature-major GRU + attention + node aggregation
# ----------------------------------------------------------------------------
def fused_kernel(plist_ref, xt_ref, slab_ref, o_ref):
    # plist_ref: (T, P) int32   xt_ref: (F, N)   slab_ref: (3D, F+D+2+D)
    # o_ref: (H*D, N_PAD) with nodes on the 128-lane axis
    T, P = plist_ref.shape
    F, N = xt_ref.shape
    D = slab_ref.shape[0] // 3
    HD, N_PAD = o_ref.shape
    H = HD // D

    slab = slab_ref[...]
    w_ih = slab[:, :F]                            # (3D, F)
    w_hh = slab[:, F:F + D]                       # (3D, D)
    b_ih = slab[:, F + D:F + D + 1]               # (3D, 1)
    b_hh = slab[:, F + D + 1:F + D + 2]           # (3D, 1)
    a_t = slab[:H, F + D + 2:F + D + 2 + D]       # (H, D)

    xt = xt_ref[...]                              # (F, N)
    plist = plist_ref[...]                        # (T, P) int32

    # ---- in-kernel embedding gather (one-hot MXU matmuls) + hoisted input proj ----
    iota_n = jax.lax.broadcasted_iota(jnp.int32, (N, P), 0)
    b_rz = jnp.broadcast_to(b_ih[:2 * D] + b_hh[:2 * D], (2 * D, P))  # hoisted
    b_in = jnp.broadcast_to(b_ih[2 * D:], (D, P))
    b_hn = jnp.broadcast_to(b_hh[2 * D:], (D, P))

    gi_rz, gi_n = [], []
    for t in range(T):  # static, fully unrolled; all off the serial chain
        onehot_t = (iota_n == plist[t:t + 1, :]).astype(jnp.float32)     # (N, P)
        x_t = jnp.dot(xt, onehot_t, preferred_element_type=jnp.float32)  # (F, P)
        gi_t = jnp.dot(w_ih, x_t, preferred_element_type=jnp.float32)    # (3D, P)
        gi_rz.append(gi_t[:2 * D] + b_rz)
        gi_n.append(gi_t[2 * D:] + b_in)

    # ---- GRU recurrence, feature-major: h^T is (D, P), paths on the 128-lane axis ----
    hT = jnp.zeros((D, P), jnp.float32)
    for t in range(T):
        if t == 0:                                  # h == 0 -> skip the matmul
            rz = jax.nn.sigmoid(gi_rz[0])
            gh_n = b_hn
        else:
            ghh = jnp.dot(w_hh, hT, preferred_element_type=jnp.float32)  # (3D, P)
            rz = jax.nn.sigmoid(gi_rz[t] + ghh[:2 * D])                  # (2D, P)
            gh_n = ghh[2 * D:] + b_hn
        r = rz[:D]
        z = rz[D:2 * D]
        n_t = jnp.tanh(gi_n[t] + r * gh_n)
        hT = n_t + z * (hT - n_t)                                        # (D, P)

    # ---- attention scores ----
    sT = jnp.dot(a_t, hT, preferred_element_type=jnp.float32)            # (H, P)
    sT = jnp.where(sT >= 0, sT, 0.2 * sT)                                # leaky_relu(0.2)
    att_unT = jnp.exp(sT)                                                # (H, P)

    # ---- incidence matrix built in-kernel, lane-padded to N_PAD nodes ----
    last = plist[T - 1:T, :]                                             # (1, P)
    iota_big = jax.lax.broadcasted_iota(jnp.int32, (N_PAD, P), 0)
    m_big = (iota_big == last).astype(jnp.float32)                       # (N_PAD, P)
    mT = jnp.transpose(m_big)                                            # (P, N_PAD)

    # per-node softmax-style normalization (matmul-form one-hot gathers)
    sumT = jnp.dot(att_unT, mT, preferred_element_type=jnp.float32)      # (H, N_PAD)
    inv = pl.reciprocal(jnp.maximum(sumT, 1e-30), approx=True)           # EUP slot, NaN-safe
    att_lowT = jnp.dot(inv, m_big, preferred_element_type=jnp.float32)   # (H, P)
    att_nT = att_unT * att_lowT                                          # (H, P)

    # weighted aggregation: W^T[h*D+d, p] = att_n[p, h] * emb[p, d]
    wT = jnp.concatenate([att_nT[h:h + 1, :] * hT for h in range(H)], axis=0)  # (H*D, P)

    # out^T (H*D, N_PAD) = W^T @ M^T  -- single matmul, lane-dense full-block store
    o_ref[...] = jnp.dot(wT, mT, preferred_element_type=jnp.float32)


# ----------------------------------------------------------------------------
# Wrapper: full forward pass (jitted by the caller so the tiny glue ops fuse)
# ----------------------------------------------------------------------------
def path_agg_att_forward(x, path_list, slab, config):
    N = config.n
    D, H = config.out_dim, config.head_num
    N_PAD = 128

    plist_t = path_list.T.astype(jnp.int32)       # (T, P)
    x_t = x.T.astype(jnp.float32)                 # (F, N)

    out_t = pl.pallas_call(
        fused_kernel,
        out_shape=jax.ShapeDtypeStruct((H * D, N_PAD), jnp.float32),
        in_specs=[
            pl.BlockSpec(memory_space=pltpu.MemorySpace.VMEM),
            pl.BlockSpec(memory_space=pltpu.MemorySpace.VMEM),
            pl.BlockSpec(memory_space=pltpu.MemorySpace.VMEM),
        ],
        out_specs=pl.BlockSpec(memory_space=pltpu.MemorySpace.VMEM),
    )(plist_t, x_t, slab)

    # layout plumbing only: restore (N, H*D) orientation of node_att_emb
    return out_t[:, :N].T


# ----------------------------------------------------------------------------
# Pure-JAX reference (mirrors the torch forward exactly, incl. reshape/repeat)
# ----------------------------------------------------------------------------
def reference_forward(x, path_list, params, config):
    N, D, H = config.n, config.out_dim, config.head_num
    pf = x[path_list].astype(jnp.float32)
    P, T, _ = pf.shape
    wih, whh = params["w_ih"], params["w_hh"]
    bih, bhh = params["b_ih"], params["b_hh"]

    h = jnp.zeros((P, D), jnp.float32)
    for t in range(T):
        gi = pf[:, t, :] @ wih.T + bih
        gh = h @ whh.T + bhh
        r = jax.nn.sigmoid(gi[:, :D] + gh[:, :D])
        z = jax.nn.sigmoid(gi[:, D:2 * D] + gh[:, D:2 * D])
        n_t = jnp.tanh(gi[:, 2 * D:] + r * gh[:, 2 * D:])
        h = (1.0 - z) * n_t + z * h
    path_emb = h

    s = path_emb @ params["a"]
    s = jnp.where(s >= 0, s, 0.2 * s)
    path_att_un = jnp.exp(s)

    M = (path_list[:, -1][None, :] == jnp.arange(N)[:, None]).astype(jnp.float32)
    path_att_un_sum_by_node = M @ path_att_un
    path_att_un_low = M.T @ (1.0 / path_att_un_sum_by_node)
    path_att_n = path_att_un * path_att_un_low
    path_att_n = jnp.repeat(path_att_n.reshape(-1, 1), D, axis=1).reshape(P, H * D)
    path_emb_rep = jnp.tile(path_emb, (1, H))
    return M @ (path_att_n * path_emb_rep)


# ----------------------------------------------------------------------------
# Main
# ----------------------------------------------------------------------------
if __name__ == "__main__":
    cfg = Config()
    key = jax.random.PRNGKey(0)
    k_x, k_walk, k1, k2, k3, k4, k5 = jax.random.split(key, 7)

    # node features
    x = jax.random.normal(k_x, (cfg.n, cfg.in_dim), dtype=jnp.float32)

    # synthetic graph: ring, 2 neighbors per node (stands in for `adj`)
    idx = jnp.arange(cfg.n, dtype=jnp.int32)
    neighbors = jnp.stack([(idx - 1) % cfg.n, (idx + 1) % cfg.n], axis=1)  # (n, 2)

    # deterministic GRU / attention parameters (shapes from nn.GRU(in_dim, out_dim))
    scale = 1.0 / math.sqrt(cfg.out_dim)
    params = {
        "w_ih": jax.random.uniform(k1, (3 * cfg.out_dim, cfg.in_dim),
                                   minval=-scale, maxval=scale, dtype=jnp.float32),
        "w_hh": jax.random.uniform(k2, (3 * cfg.out_dim, cfg.out_dim),
                                   minval=-scale, maxval=scale, dtype=jnp.float32),
        "b_ih": jax.random.uniform(k3, (3 * cfg.out_dim,),
                                   minval=-scale, maxval=scale, dtype=jnp.float32),
        "b_hh": jax.random.uniform(k4, (3 * cfg.out_dim,),
                                   minval=-scale, maxval=scale, dtype=jnp.float32),
        # torch.rand(out_dim, head_num) * 2 - 1  -> uniform(-1, 1)
        "a": jax.random.uniform(k5, (cfg.out_dim, cfg.head_num),
                                minval=-1.0, maxval=1.0, dtype=jnp.float32),
    }
    slab = pack_params(params, cfg)   # packed once at init (single VMEM input)

    # paths (strategy 'DFS' -> p=10, q=0.1 in torch; bias not reproducible, see TODO)
    path_list = generate_random_walk(neighbors, cfg, k_walk)  # (128, 4) int32
    assert path_list.shape == (cfg.walks_per_node * cfg.n, cfg.walk_len)

    fwd = jax.jit(functools.partial(path_agg_att_forward, config=cfg))
    out = fwd(x, path_list, slab)
    out = jax.block_until_ready(out)

    ref = reference_forward(x, path_list, params, cfg)
    np.testing.assert_allclose(np.asarray(out), np.asarray(ref), rtol=1e-2, atol=1e-2)

    print("KERNEL_OK")
</pallas_src>

<mosaic_0001>
module attributes {stable_mosaic.version = 11 : i64} {
  func.func @fused_kernel(%arg0: memref<4x128xi32, #tpu.memory_space<vmem>>, %arg1: memref<8x16xf32, #tpu.memory_space<vmem>>, %arg2: memref<48x42xf32, #tpu.memory_space<vmem>>, %arg3: memref<32x128xf32, #tpu.memory_space<vmem>>) attributes {dimension_semantics = [], scalar_prefetch = 0 : i64, scratch_operands = 0 : i64, tpu.core_type = #tpu.core_type<tc>} {
    %c0 = arith.constant 0 : index
    %c0_0 = arith.constant 0 : index
    %0 = vector.load %arg2[%c0, %c0_0] : memref<48x42xf32, #tpu.memory_space<vmem>>, vector<48x42xf32>
    %1 = vector.extract_strided_slice %0 {offsets = [0, 0], sizes = [48, 8], strides = [1, 1]} : vector<48x42xf32> to vector<48x8xf32>
    %2 = vector.extract_strided_slice %0 {offsets = [0, 8], sizes = [48, 16], strides = [1, 1]} : vector<48x42xf32> to vector<48x16xf32>
    %3 = vector.extract_strided_slice %0 {offsets = [0, 24], sizes = [48, 1], strides = [1, 1]} : vector<48x42xf32> to vector<48x1xf32>
    %4 = vector.extract_strided_slice %0 {offsets = [0, 25], sizes = [48, 1], strides = [1, 1]} : vector<48x42xf32> to vector<48x1xf32>
    %5 = vector.extract_strided_slice %0 {offsets = [0, 26], sizes = [2, 16], strides = [1, 1]} : vector<48x42xf32> to vector<2x16xf32>
    %c0_1 = arith.constant 0 : index
    %c0_2 = arith.constant 0 : index
    %6 = vector.load %arg1[%c0_1, %c0_2] : memref<8x16xf32, #tpu.memory_space<vmem>>, vector<8x16xf32>
    %c0_3 = arith.constant 0 : index
    %c0_4 = arith.constant 0 : index
    %7 = vector.load %arg0[%c0_3, %c0_4] : memref<4x128xi32, #tpu.memory_space<vmem>>, vector<4x128xi32>
    %8 = tpu.iota {dimensions = array<i32: 0>} : vector<16x128xi32>
    %9 = vector.extract_strided_slice %3 {offsets = [0, 0], sizes = [32, 1], strides = [1, 1]} : vector<48x1xf32> to vector<32x1xf32>
    %10 = vector.extract_strided_slice %4 {offsets = [0, 0], sizes = [32, 1], strides = [1, 1]} : vector<48x1xf32> to vector<32x1xf32>
    %11 = arith.addf %9, %10 : vector<32x1xf32>
    %12 = vector.shape_cast %11 : vector<32x1xf32> to vector<32x1xf32>
    %13 = vector.broadcast %12 : vector<32x1xf32> to vector<32x128xf32>
    %14 = vector.extract_strided_slice %3 {offsets = [32, 0], sizes = [16, 1], strides = [1, 1]} : vector<48x1xf32> to vector<16x1xf32>
    %15 = vector.shape_cast %14 : vector<16x1xf32> to vector<16x1xf32>
    %16 = vector.broadcast %15 : vector<16x1xf32> to vector<16x128xf32>
    %17 = vector.extract_strided_slice %4 {offsets = [32, 0], sizes = [16, 1], strides = [1, 1]} : vector<48x1xf32> to vector<16x1xf32>
    %18 = vector.shape_cast %17 : vector<16x1xf32> to vector<16x1xf32>
    %19 = vector.broadcast %18 : vector<16x1xf32> to vector<16x128xf32>
    %20 = vector.extract_strided_slice %7 {offsets = [0, 0], sizes = [1, 128], strides = [1, 1]} : vector<4x128xi32> to vector<1x128xi32>
    %21 = vector.broadcast %20 : vector<1x128xi32> to vector<16x128xi32>
    %22 = arith.cmpi eq, %8, %21 : vector<16x128xi32>
    %23 = arith.extui %22 : vector<16x128xi1> to vector<16x128xi32>
    %24 = arith.sitofp %23 : vector<16x128xi32> to vector<16x128xf32>
    %cst = arith.constant dense<0.000000e+00> : vector<8x128xf32>
    %25 = tpu.matmul %6, %24, %cst {dimension_numbers = #tpu.dot_dimension_numbers<[1], [0], [0], [1], [0, 0, 1, 1], [], []>} : vector<8x16xf32>, vector<16x128xf32>, vector<8x128xf32> -> vector<8x128xf32>
    %cst_5 = arith.constant dense<0.000000e+00> : vector<48x128xf32>
    %26 = tpu.matmul %1, %25, %cst_5 {dimension_numbers = #tpu.dot_dimension_numbers<[1], [0], [0], [1], [0, 0, 1, 1], [], []>} : vector<48x8xf32>, vector<8x128xf32>, vector<48x128xf32> -> vector<48x128xf32>
    %27 = vector.extract_strided_slice %26 {offsets = [0, 0], sizes = [32, 128], strides = [1, 1]} : vector<48x128xf32> to vector<32x128xf32>
    %28 = arith.addf %27, %13 : vector<32x128xf32>
    %29 = vector.extract_strided_slice %26 {offsets = [32, 0], sizes = [16, 128], strides = [1, 1]} : vector<48x128xf32> to vector<16x128xf32>
    %30 = arith.addf %29, %16 : vector<16x128xf32>
    %31 = vector.extract_strided_slice %7 {offsets = [1, 0], sizes = [1, 128], strides = [1, 1]} : vector<4x128xi32> to vector<1x128xi32>
    %32 = vector.broadcast %31 : vector<1x128xi32> to vector<16x128xi32>
    %33 = arith.cmpi eq, %8, %32 : vector<16x128xi32>
    %34 = arith.extui %33 : vector<16x128xi1> to vector<16x128xi32>
    %35 = arith.sitofp %34 : vector<16x128xi32> to vector<16x128xf32>
    %cst_6 = arith.constant dense<0.000000e+00> : vector<8x128xf32>
    %36 = tpu.matmul %6, %35, %cst_6 {dimension_numbers = #tpu.dot_dimension_numbers<[1], [0], [0], [1], [0, 0, 1, 1], [], []>} : vector<8x16xf32>, vector<16x128xf32>, vector<8x128xf32> -> vector<8x128xf32>
    %cst_7 = arith.constant dense<0.000000e+00> : vector<48x128xf32>
    %37 = tpu.matmul %1, %36, %cst_7 {dimension_numbers = #tpu.dot_dimension_numbers<[1], [0], [0], [1], [0, 0, 1, 1], [], []>} : vector<48x8xf32>, vector<8x128xf32>, vector<48x128xf32> -> vector<48x128xf32>
    %38 = vector.extract_strided_slice %37 {offsets = [0, 0], sizes = [32, 128], strides = [1, 1]} : vector<48x128xf32> to vector<32x128xf32>
    %39 = arith.addf %38, %13 : vector<32x128xf32>
    %40 = vector.extract_strided_slice %37 {offsets = [32, 0], sizes = [16, 128], strides = [1, 1]} : vector<48x128xf32> to vector<16x128xf32>
    %41 = arith.addf %40, %16 : vector<16x128xf32>
    %42 = vector.extract_strided_slice %7 {offsets = [2, 0], sizes = [1, 128], strides = [1, 1]} : vector<4x128xi32> to vector<1x128xi32>
    %43 = vector.broadcast %42 : vector<1x128xi32> to vector<16x128xi32>
    %44 = arith.cmpi eq, %8, %43 : vector<16x128xi32>
    %45 = arith.extui %44 : vector<16x128xi1> to vector<16x128xi32>
    %46 = arith.sitofp %45 : vector<16x128xi32> to vector<16x128xf32>
    %cst_8 = arith.constant dense<0.000000e+00> : vector<8x128xf32>
    %47 = tpu.matmul %6, %46, %cst_8 {dimension_numbers = #tpu.dot_dimension_numbers<[1], [0], [0], [1], [0, 0, 1, 1], [], []>} : vector<8x16xf32>, vector<16x128xf32>, vector<8x128xf32> -> vector<8x128xf32>
    %cst_9 = arith.constant dense<0.000000e+00> : vector<48x128xf32>
    %48 = tpu.matmul %1, %47, %cst_9 {dimension_numbers = #tpu.dot_dimension_numbers<[1], [0], [0], [1], [0, 0, 1, 1], [], []>} : vector<48x8xf32>, vector<8x128xf32>, vector<48x128xf32> -> vector<48x128xf32>
    %49 = vector.extract_strided_slice %48 {offsets = [0, 0], sizes = [32, 128], strides = [1, 1]} : vector<48x128xf32> to vector<32x128xf32>
    %50 = arith.addf %49, %13 : vector<32x128xf32>
    %51 = vector.extract_strided_slice %48 {offsets = [32, 0], sizes = [16, 128], strides = [1, 1]} : vector<48x128xf32> to vector<16x128xf32>
    %52 = arith.addf %51, %16 : vector<16x128xf32>
    %53 = vector.extract_strided_slice %7 {offsets = [3, 0], sizes = [1, 128], strides = [1, 1]} : vector<4x128xi32> to vector<1x128xi32>
    %54 = vector.broadcast %53 : vector<1x128xi32> to vector<16x128xi32>
    %55 = arith.cmpi eq, %8, %54 : vector<16x128xi32>
    %56 = arith.extui %55 : vector<16x128xi1> to vector<16x128xi32>
    %57 = arith.sitofp %56 : vector<16x128xi32> to vector<16x128xf32>
    %cst_10 = arith.constant dense<0.000000e+00> : vector<8x128xf32>
    %58 = tpu.matmul %6, %57, %cst_10 {dimension_numbers = #tpu.dot_dimension_numbers<[1], [0], [0], [1], [0, 0, 1, 1], [], []>} : vector<8x16xf32>, vector<16x128xf32>, vector<8x128xf32> -> vector<8x128xf32>
    %cst_11 = arith.constant dense<0.000000e+00> : vector<48x128xf32>
    %59 = tpu.matmul %1, %58, %cst_11 {dimension_numbers = #tpu.dot_dimension_numbers<[1], [0], [0], [1], [0, 0, 1, 1], [], []>} : vector<48x8xf32>, vector<8x128xf32>, vector<48x128xf32> -> vector<48x128xf32>
    %60 = vector.extract_strided_slice %59 {offsets = [0, 0], sizes = [32, 128], strides = [1, 1]} : vector<48x128xf32> to vector<32x128xf32>
    %61 = arith.addf %60, %13 : vector<32x128xf32>
    %62 = vector.extract_strided_slice %59 {offsets = [32, 0], sizes = [16, 128], strides = [1, 1]} : vector<48x128xf32> to vector<16x128xf32>
    %63 = arith.addf %62, %16 : vector<16x128xf32>
    %cst_12 = arith.constant 0.000000e+00 : f32
    %64 = vector.broadcast %cst_12 : f32 to vector<16x128xf32>
    %65 = arith.negf %28 : vector<32x128xf32>
    %66 = math.exp %65 : vector<32x128xf32>
    %cst_13 = arith.constant 1.000000e+00 : f32
    %67 = vector.broadcast %cst_13 : f32 to vector<32x128xf32>
    %68 = arith.addf %67, %66 : vector<32x128xf32>
    %69 = arith.divf %67, %68 : vector<32x128xf32>
    %70 = vector.extract_strided_slice %69 {offsets = [0, 0], sizes = [16, 128], strides = [1, 1]} : vector<32x128xf32> to vector<16x128xf32>
    %71 = vector.extract_strided_slice %69 {offsets = [16, 0], sizes = [16, 128], strides = [1, 1]} : vector<32x128xf32> to vector<16x128xf32>
    %72 = arith.mulf %70, %19 : vector<16x128xf32>
    %73 = arith.addf %30, %72 : vector<16x128xf32>
    %74 = math.tanh %73 : vector<16x128xf32>
    %75 = arith.subf %64, %74 : vector<16x128xf32>
    %76 = arith.mulf %71, %75 : vector<16x128xf32>
    %77 = arith.addf %74, %76 : vector<16x128xf32>
    %cst_14 = arith.constant dense<0.000000e+00> : vector<48x128xf32>
    %78 = tpu.matmul %2, %77, %cst_14 {dimension_numbers = #tpu.dot_dimension_numbers<[1], [0], [0], [1], [0, 0, 1, 1], [], []>} : vector<48x16xf32>, vector<16x128xf32>, vector<48x128xf32> -> vector<48x128xf32>
    %79 = vector.extract_strided_slice %78 {offsets = [0, 0], sizes = [32, 128], strides = [1, 1]} : vector<48x128xf32> to vector<32x128xf32>
    %80 = arith.addf %39, %79 : vector<32x128xf32>
    %81 = arith.negf %80 : vector<32x128xf32>
    %82 = math.exp %81 : vector<32x128xf32>
    %cst_15 = arith.constant 1.000000e+00 : f32
    %83 = vector.broadcast %cst_15 : f32 to vector<32x128xf32>
    %84 = arith.addf %83, %82 : vector<32x128xf32>
    %85 = arith.divf %83, %84 : vector<32x128xf32>
    %86 = vector.extract_strided_slice %78 {offsets = [32, 0], sizes = [16, 128], strides = [1, 1]} : vector<48x128xf32> to vector<16x128xf32>
    %87 = arith.addf %86, %19 : vector<16x128xf32>
    %88 = vector.extract_strided_slice %85 {offsets = [0, 0], sizes = [16, 128], strides = [1, 1]} : vector<32x128xf32> to vector<16x128xf32>
    %89 = vector.extract_strided_slice %85 {offsets = [16, 0], sizes = [16, 128], strides = [1, 1]} : vector<32x128xf32> to vector<16x128xf32>
    %90 = arith.mulf %88, %87 : vector<16x128xf32>
    %91 = arith.addf %41, %90 : vector<16x128xf32>
    %92 = math.tanh %91 : vector<16x128xf32>
    %93 = arith.subf %77, %92 : vector<16x128xf32>
    %94 = arith.mulf %89, %93 : vector<16x128xf32>
    %95 = arith.addf %92, %94 : vector<16x128xf32>
    %cst_16 = arith.constant dense<0.000000e+00> : vector<48x128xf32>
    %96 = tpu.matmul %2, %95, %cst_16 {dimension_numbers = #tpu.dot_dimension_numbers<[1], [0], [0], [1], [0, 0, 1, 1], [], []>} : vector<48x16xf32>, vector<16x128xf32>, vector<48x128xf32> -> vector<48x128xf32>
    %97 = vector.extract_strided_slice %96 {offsets = [0, 0], sizes = [32, 128], strides = [1, 1]} : vector<48x128xf32> to vector<32x128xf32>
    %98 = arith.addf %50, %97 : vector<32x128xf32>
    %99 = arith.negf %98 : vector<32x128xf32>
    %100 = math.exp %99 : vector<32x128xf32>
    %cst_17 = arith.constant 1.000000e+00 : f32
    %101 = vector.broadcast %cst_17 : f32 to vector<32x128xf32>
    %102 = arith.addf %101, %100 : vector<32x128xf32>
    %103 = arith.divf %101, %102 : vector<32x128xf32>
    %104 = vector.extract_strided_slice %96 {offsets = [32, 0], sizes = [16, 128], strides = [1, 1]} : vector<48x128xf32> to vector<16x128xf32>
    %105 = arith.addf %104, %19 : vector<16x128xf32>
    %106 = vector.extract_strided_slice %103 {offsets = [0, 0], sizes = [16, 128], strides = [1, 1]} : vector<32x128xf32> to vector<16x128xf32>
    %107 = vector.extract_strided_slice %103 {offsets = [16, 0], sizes = [16, 128], strides = [1, 1]} : vector<32x128xf32> to vector<16x128xf32>
    %108 = arith.mulf %106, %105 : vector<16x128xf32>
    %109 = arith.addf %52, %108 : vector<16x128xf32>
    %110 = math.tanh %109 : vector<16x128xf32>
    %111 = arith.subf %95, %110 : vector<16x128xf32>
    %112 = arith.mulf %107, %111 : vector<16x128xf32>
    %113 = arith.addf %110, %112 : vector<16x128xf32>
    %cst_18 = arith.constant dense<0.000000e+00> : vector<48x128xf32>
    %114 = tpu.matmul %2, %113, %cst_18 {dimension_numbers = #tpu.dot_dimension_numbers<[1], [0], [0], [1], [0, 0, 1, 1], [], []>} : vector<48x16xf32>, vector<16x128xf32>, vector<48x128xf32> -> vector<48x128xf32>
    %115 = vector.extract_strided_slice %114 {offsets = [0, 0], sizes = [32, 128], strides = [1, 1]} : vector<48x128xf32> to vector<32x128xf32>
    %116 = arith.addf %61, %115 : vector<32x128xf32>
    %117 = arith.negf %116 : vector<32x128xf32>
    %118 = math.exp %117 : vector<32x128xf32>
    %cst_19 = arith.constant 1.000000e+00 : f32
    %119 = vector.broadcast %cst_19 : f32 to vector<32x128xf32>
    %120 = arith.addf %119, %118 : vector<32x128xf32>
    %121 = arith.divf %119, %120 : vector<32x128xf32>
    %122 = vector.extract_strided_slice %114 {offsets = [32, 0], sizes = [16, 128], strides = [1, 1]} : vector<48x128xf32> to vector<16x128xf32>
    %123 = arith.addf %122, %19 : vector<16x128xf32>
    %124 = vector.extract_strided_slice %121 {offsets = [0, 0], sizes = [16, 128], strides = [1, 1]} : vector<32x128xf32> to vector<16x128xf32>
    %125 = vector.extract_strided_slice %121 {offsets = [16, 0], sizes = [16, 128], strides = [1, 1]} : vector<32x128xf32> to vector<16x128xf32>
    %126 = arith.mulf %124, %123 : vector<16x128xf32>
    %127 = arith.addf %63, %126 : vector<16x128xf32>
    %128 = math.tanh %127 : vector<16x128xf32>
    %129 = arith.subf %113, %128 : vector<16x128xf32>
    %130 = arith.mulf %125, %129 : vector<16x128xf32>
    %131 = arith.addf %128, %130 : vector<16x128xf32>
    %cst_20 = arith.constant dense<0.000000e+00> : vector<2x128xf32>
    %132 = tpu.matmul %5, %131, %cst_20 {dimension_numbers = #tpu.dot_dimension_numbers<[1], [0], [0], [1], [0, 0, 1, 1], [], []>} : vector<2x16xf32>, vector<16x128xf32>, vector<2x128xf32> -> vector<2x128xf32>
    %cst_21 = arith.constant 0.000000e+00 : f32
    %133 = vector.broadcast %cst_21 : f32 to vector<2x128xf32>
    %134 = arith.cmpf oge, %132, %133 : vector<2x128xf32>
    %cst_22 = arith.constant 2.000000e-01 : f32
    %135 = vector.broadcast %cst_22 : f32 to vector<2x128xf32>
    %136 = arith.mulf %135, %132 : vector<2x128xf32>
    %137 = arith.select %134, %132, %136 : vector<2x128xi1>, vector<2x128xf32>
    %138 = math.exp %137 : vector<2x128xf32>
    %139 = vector.extract_strided_slice %7 {offsets = [3, 0], sizes = [1, 128], strides = [1, 1]} : vector<4x128xi32> to vector<1x128xi32>
    %140 = tpu.iota {dimensions = array<i32: 0>} : vector<128x128xi32>
    %141 = vector.broadcast %139 : vector<1x128xi32> to vector<128x128xi32>
    %142 = arith.cmpi eq, %140, %141 : vector<128x128xi32>
    %143 = arith.extui %142 : vector<128x128xi1> to vector<128x128xi32>
    %144 = arith.sitofp %143 : vector<128x128xi32> to vector<128x128xf32>
    %145 = tpu.transpose %144, [1, 0] : vector<128x128xf32> -> vector<128x128xf32>
    %cst_23 = arith.constant dense<0.000000e+00> : vector<2x128xf32>
    %146 = tpu.matmul %138, %145, %cst_23 {dimension_numbers = #tpu.dot_dimension_numbers<[1], [0], [0], [1], [0, 0, 1, 1], [], []>} : vector<2x128xf32>, vector<128x128xf32>, vector<2x128xf32> -> vector<2x128xf32>
    %cst_24 = arith.constant 1.000000e-30 : f32
    %147 = vector.broadcast %cst_24 : f32 to vector<2x128xf32>
    %148 = arith.maximumf %146, %147 : vector<2x128xf32>
    %149 = tpu.reciprocal %148 {approx = true} : vector<2x128xf32> -> vector<2x128xf32>
    %cst_25 = arith.constant dense<0.000000e+00> : vector<2x128xf32>
    %150 = tpu.matmul %149, %144, %cst_25 {dimension_numbers = #tpu.dot_dimension_numbers<[1], [0], [0], [1], [0, 0, 1, 1], [], []>} : vector<2x128xf32>, vector<128x128xf32>, vector<2x128xf32> -> vector<2x128xf32>
    %151 = arith.mulf %138, %150 : vector<2x128xf32>
    %152 = vector.extract_strided_slice %151 {offsets = [0, 0], sizes = [1, 128], strides = [1, 1]} : vector<2x128xf32> to vector<1x128xf32>
    %153 = vector.broadcast %152 : vector<1x128xf32> to vector<16x128xf32>
    %154 = arith.mulf %153, %131 : vector<16x128xf32>
    %155 = vector.extract_strided_slice %151 {offsets = [1, 0], sizes = [1, 128], strides = [1, 1]} : vector<2x128xf32> to vector<1x128xf32>
    %156 = vector.broadcast %155 : vector<1x128xf32> to vector<16x128xf32>
    %157 = arith.mulf %156, %131 : vector<16x128xf32>
    %158 = tpu.concatenate %154, %157 in 0 : vector<16x128xf32>, vector<16x128xf32> -> vector<32x128xf32>
    %cst_26 = arith.constant dense<0.000000e+00> : vector<32x128xf32>
    %159 = tpu.matmul %158, %145, %cst_26 {dimension_numbers = #tpu.dot_dimension_numbers<[1], [0], [0], [1], [0, 0, 1, 1], [], []>} : vector<32x128xf32>, vector<128x128xf32>, vector<32x128xf32> -> vector<32x128xf32>
    %c0_27 = arith.constant 0 : index
    %c0_28 = arith.constant 0 : index
    %160 = vector.load %arg3[%c0_27, %c0_28] : memref<32x128xf32, #tpu.memory_space<vmem>>, vector<32x128xf32>
    tpu.vector_store %arg3[%c0_27, %c0_28], %159 {strides = array<i32>} : memref<32x128xf32, #tpu.memory_space<vmem>>, vector<32x128xf32>,
    return
  }
}

</mosaic_0001>

<llo_original>
// kernel: path_agg_att_forward.1
$region0: #{path_agg_att_forward.1}
  #allocation0 [shape = 'u32[]', space=smem, size = 0x4, offset = 0x4, fixed_abs, tag = 'smem constant byte address 0x4 - core index']
  #allocation1 [shape = 'u32[144,128]{1,0:T(1,128)}', space=vmem, size = 0x12000, scoped, tag = 'internal scratch']
  %s0 = inlined_call_operand.vmem [shape: s32[4,128], index: 0, kind: input, shape index: {}]
  %s1 = inlined_call_operand.hbm [shape: f32[8,16], index: 1, kind: input, shape index: {}]
  %s2 = inlined_call_operand.hbm [shape: f32[48,42], index: 2, kind: input, shape index: {}]
  %s3 = inlined_call_operand.vmem [shape: f32[32,128], index: 3, kind: output, shape index: {}]
  %s4 = sld [smem:[#allocation0]]
  $region30: #{path_agg_att_forward.1} parent=0
    _
  %s6 = ssub.s32 1, %s4
  %s7 = scalar_select 0, %s6, %s4
  $region1: #{path_agg_att_forward.1} parent=0
    #allocation2 [shape = 'u8[4096]{0}', space=vmem, size = 0x1000, scoped, tag = 'input window, operand 1, single buffered']
    #allocation3 [shape = 's32[1]{0}', space=sflag, size = 0x4, scoped, tag = 'scoped memory for path_agg_att_forward.1']
    #allocation4 [shape = 'u8[24576]{0}', space=vmem, size = 0x6000, scoped, tag = 'input window, operand 2, single buffered']
    #allocation5 [shape = 's32[1]{0}', space=sflag, size = 0x4, scoped, tag = 'scoped memory for path_agg_att_forward.1']
    %8 = vsyncpa [#allocation3], 0
    %9 = vsyncpa [#allocation5], 0
    // Predicated region
    $region2: #{path_agg_att_forward.1} parent=1 // pred_check
      _
    $region3: #{path_agg_att_forward.1} parent=1 // pred_check_branch
      %11 = sbr.rel (0) target = $region5
    $region4: #{path_agg_att_forward.1} parent=1 // pred_region
      _
    $region5: #{path_agg_att_forward.1} parent=1 // pred_fallthru
      _
    // Predicated region
    $region6: #{path_agg_att_forward.1} parent=1 // pred_check
      _
    $region7: #{path_agg_att_forward.1} parent=1 // pred_check_branch
      %13 = sbr.rel (0) target = $region9
    $region8: #{path_agg_att_forward.1} parent=1 // pred_region
      %s15 = ssub.s32 128, 128
      %16 = vsyncadd [#allocation3], %s15
      %s18 = sshll.u32 [#allocation2], 4
      %s19 = int_to_ptr.vmem [resolvable:$true] %s18
      %21 = dma.hbm_to_vmem [thread:$0]  %s1, 128, %s19, [#allocation3]
    $region9: #{path_agg_att_forward.1} parent=1 // pred_fallthru
      _
    // Predicated region
    $region10: #{path_agg_att_forward.1} parent=1 // pred_check
      _
    $region11: #{path_agg_att_forward.1} parent=1 // pred_check_branch
      %23 = sbr.rel (0) target = $region13
    $region12: #{path_agg_att_forward.1} parent=1 // pred_region
      %s25 = ssub.s32 768, 768
      %26 = vsyncadd [#allocation5], %s25
      %s27 = sshll.u32 [#allocation4], 4
      %s28 = int_to_ptr.vmem [resolvable:$true] %s27
      %33 = dma.hbm_to_vmem [thread:$0]  %s2, 768, %s28, [#allocation5], 128, 128, 8
    $region13: #{path_agg_att_forward.1} parent=1 // pred_fallthru
      _
    // Predicated region
    $region14: #{path_agg_att_forward.1} parent=1 // pred_check
      _
    $region15: #{path_agg_att_forward.1} parent=1 // pred_check_branch
      %35 = sbr.rel (0) target = $region17
    $region16: #{path_agg_att_forward.1} parent=1 // pred_region
      %36 = dma.done [#allocation3], 128
    $region17: #{path_agg_att_forward.1} parent=1 // pred_fallthru
      _
    // Predicated region
    $region18: #{path_agg_att_forward.1} parent=1 // pred_check
      _
    $region19: #{path_agg_att_forward.1} parent=1 // pred_check_branch
      %38 = sbr.rel (0) target = $region21
    $region20: #{path_agg_att_forward.1} parent=1 // pred_region
      %39 = dma.done [#allocation5], 768
    $region21: #{path_agg_att_forward.1} parent=1 // pred_fallthru
      _
    %v40 = vld [vmem:[#allocation4] sm:$0xff]
    %v41 = vld [vmem:[#allocation4 + $0x8] sm:$0xff]
    %v42 = vld [vmem:[#allocation4 + $0x10] sm:$0xff]
    %v43 = vld [vmem:[#allocation4 + $0x18] sm:$0xff]
    %v44 = vld [vmem:[#allocation4 + $0x20] sm:$0xff]
    %v45 = vld [vmem:[#allocation4 + $0x28] sm:$0xff]
    %v46 = vld [vmem:[#allocation2] sm:$0xff]
    %v47 = vld [vmem:[%s0] sm:$0xf]
    %v48 = vlaneseq
    %v49 = vshrl.u32 %v48, 7
    %v50 = vadd.s32 %v49, 8
    %55 = vrot.lane.b32.xlu0 %v40, 127
    %v56 = vpop.permute.xlu0 %55
    %57 = vrot.lane.b32.xlu0 %v41, 127
    %v58 = vpop.permute.xlu0 %57
    %59 = vrot.lane.b32.xlu0 %v42, 127
    %v60 = vpop.permute.xlu0 %59
    %61 = vrot.lane.b32.xlu0 %v43, 127
    %v62 = vpop.permute.xlu0 %61
    %v67 = vadd.f32 %v40, %v56
    %v68 = vadd.f32 %v41, %v58
    %v69 = vadd.f32 %v42, %v60
    %v70 = vadd.f32 %v43, %v62
    %72 = vset.pattern.permute.xlu0 24
    %73 = vperm.xlu0 %72, %v67
    %v74 = vpop.permute.xlu0 %73
    %77 = vset.pattern.permute.xlu0 24
    %78 = vperm.xlu0 %77, %v68
    %v79 = vpop.permute.xlu0 %78
    %82 = vset.pattern.permute.xlu0 24
    %83 = vperm.xlu0 %82, %v69
    %v84 = vpop.permute.xlu0 %83
    %87 = vset.pattern.permute.xlu0 24
    %88 = vperm.xlu0 %87, %v70
    %v89 = vpop.permute.xlu0 %88
    %92 = vset.pattern.permute.xlu0 24
    %93 = vperm.xlu0 %92, %v44
    %v94 = vpop.permute.xlu0 %93
    %97 = vset.pattern.permute.xlu0 24
    %98 = vperm.xlu0 %97, %v45
    %v99 = vpop.permute.xlu0 %98
    %101 = vset.pattern.permute.xlu0 25
    %102 = vperm.xlu0 %101, %v44
    %v103 = vpop.permute.xlu0 %102
    %105 = vset.pattern.permute.xlu0 25
    %106 = vperm.xlu0 %105, %v45
    %v107 = vpop.permute.xlu0 %106
    %v109 = vlaneseq
    %v110 = vshrl.u32 %v109, 7
    %v111 = vsub.s32 0, %v110
    %v112 = vrot.slane %v47, %v111
    %vm113 = vcmp.eq.s32.totalorder %v49, %v112
    %vm114 = vcmp.eq.s32.totalorder %v50, %v112
    %v115 = vsel %vm113, 1, 0
    %v116 = vsel %vm114, 1, 0
    %v117 = vcvt.s32.f32 %v115
    %v118 = vcvt.s32.f32 %v116
    %vm119 = vcmask 130048
    %v121 = vsel %vm119, %v46, 0
    %123 = vmatprep.subr.mxu0 0.0
    %124 = vmatpush1.msra.mxu0 0.0
    %125 = vmatprep.subr.mxu0 0.0
    %126 = vmatpush1.msra.mxu0 0.0
    %127 = vmatprep.subr.mxu0 0.0
    %128 = vmatpush1.msra.mxu0 0.0
    %129 = vmatprep.subr.mxu0 0.0
    %130 = vmatpush1.msra.mxu0 0.0
    %131 = vmatprep.subr.mxu0 0.0
    %132 = vmatpush1.msra.mxu0 0.0
    %133 = vmatprep.subr.mxu0 0.0
    %134 = vmatpush1.msra.mxu0 0.0
    %135 = vmatprep.subr.mxu0 0.0
    %136 = vmatpush1.msra.mxu0 0.0
    %137 = vmatprep.subr.mxu0 0.0
    %138 = vmatpush1.msra.mxu0 0.0
    %139 = vmatprep.subr.mxu0 0.0
    %140 = vmatpush1.msra.mxu0 0.0
    %141 = vmatprep.subr.mxu0 0.0
    %142 = vmatpush1.msra.mxu0 0.0
    %143 = vmatprep.subr.mxu0 0.0
    %144 = vmatpush1.msra.mxu0 0.0
    %145 = vmatprep.subr.mxu0 0.0
    %146 = vmatpush1.msra.mxu0 0.0
    %147 = vmatprep.subr.mxu0 0.0
    %148 = vmatpush1.msra.mxu0 0.0
    %149 = vmatprep.subr.mxu0 0.0
    %150 = vmatpush1.msra.mxu0 0.0
    %151 = vmatprep.subr.mxu0 0.0
    %152 = vmatpush1.msra.mxu0 %v118
    %153 = vmatprep.subr.mxu0 0.0
    %154 = vmatpush1.msra.mxu0 %v117
    %155 = vmatprep.subr.mxu0 0.0
    %156 = vmatpush2.msra.mxu0 0.0
    %157 = vmatprep.subr.mxu0 0.0
    %158 = vmatpush2.msra.mxu0 0.0
    %159 = vmatprep.subr.mxu0 0.0
    %160 = vmatpush2.msra.mxu0 0.0
    %161 = vmatprep.subr.mxu0 0.0
    %162 = vmatpush2.msra.mxu0 0.0
    %163 = vmatprep.subr.mxu0 0.0
    %164 = vmatpush2.msra.mxu0 0.0
    %165 = vmatprep.subr.mxu0 0.0
    %166 = vmatpush2.msra.mxu0 0.0
    %167 = vmatprep.subr.mxu0 0.0
    %168 = vmatpush2.msra.mxu0 0.0
    %169 = vmatprep.subr.mxu0 0.0
    %170 = vmatpush2.msra.mxu0 0.0
    %171 = vmatprep.subr.mxu0 0.0
    %172 = vmatpush2.msra.mxu0 0.0
    %173 = vmatprep.subr.mxu0 0.0
    %174 = vmatpush2.msra.mxu0 0.0
    %175 = vmatprep.subr.mxu0 0.0
    %176 = vmatpush2.msra.mxu0 0.0
    %177 = vmatprep.subr.mxu0 0.0
    %178 = vmatpush2.msra.mxu0 0.0
    %179 = vmatprep.subr.mxu0 0.0
    %180 = vmatpush2.msra.mxu0 0.0
    %181 = vmatprep.subr.mxu0 0.0
    %182 = vmatpush2.msra.mxu0 0.0
    %183 = vmatprep.subr.mxu0 0.0
    %184 = vmatpush2.msra.mxu0 0.0
    %185 = vmatprep.subr.mxu0 0.0
    %186 = vmatpush2.msra.mxu0 0.0
    %187 = vmatprep.mubr.f32.mxu0 0.0
    %188 = vmatmul.mubr.f32.gmra.mxu0 %v121
    %v189 = vpop.f32.mrf.mxu0
    %v190 = vadd.f32 0.0, %v189
    %v191 = vpop.f32.mrf.mxu0
    %192 = vdwg.mxu0
    %vm193 = vcmask 64512
    %v194 = vsel %vm193, %v40, 0
    %v196 = vsel %vm193, %v41, 0
    %v198 = vsel %vm193, %v42, 0
    %v200 = vsel %vm193, %v43, 0
    %v202 = vsel %vm193, %v44, 0
    %v204 = vsel %vm193, %v45, 0
    %206 = vmatprep.subr.mxu0 0.0
    %207 = vmatpush1.msra.mxu0 0.0
    %208 = vmatprep.subr.mxu0 0.0
    %209 = vmatpush1.msra.mxu0 0.0
    %210 = vmatprep.subr.mxu0 0.0
    %211 = vmatpush1.msra.mxu0 0.0
    %212 = vmatprep.subr.mxu0 0.0
    %213 = vmatpush1.msra.mxu0 0.0
    %214 = vmatprep.subr.mxu0 0.0
    %215 = vmatpush1.msra.mxu0 0.0
    %216 = vmatprep.subr.mxu0 0.0
    %217 = vmatpush1.msra.mxu0 0.0
    %218 = vmatprep.subr.mxu0 0.0
    %219 = vmatpush1.msra.mxu0 0.0
    %220 = vmatprep.subr.mxu0 0.0
    %221 = vmatpush1.msra.mxu0 0.0
    %222 = vmatprep.subr.mxu0 0.0
    %223 = vmatpush1.msra.mxu0 0.0
    %224 = vmatprep.subr.mxu0 0.0
    %225 = vmatpush1.msra.mxu0 0.0
    %226 = vmatprep.subr.mxu0 0.0
    %227 = vmatpush1.msra.mxu0 0.0
    %228 = vmatprep.subr.mxu0 0.0
    %229 = vmatpush1.msra.mxu0 0.0
    %230 = vmatprep.subr.mxu0 0.0
    %231 = vmatpush1.msra.mxu0 0.0
    %232 = vmatprep.subr.mxu0 0.0
    %233 = vmatpush1.msra.mxu0 0.0
    %234 = vmatprep.subr.mxu0 0.0
    %235 = vmatpush1.msra.mxu0 0.0
    %236 = vmatprep.subr.mxu0 0.0
    %237 = vmatpush1.msra.mxu0 %v190
    %238 = vmatprep.subr.mxu0 0.0
    %239 = vmatpush2.msra.mxu0 0.0
    %240 = vmatprep.subr.mxu0 0.0
    %241 = vmatpush2.msra.mxu0 0.0
    %242 = vmatprep.subr.mxu0 0.0
    %243 = vmatpush2.msra.mxu0 0.0
    %244 = vmatprep.subr.mxu0 0.0
    %245 = vmatpush2.msra.mxu0 0.0
    %246 = vmatprep.subr.mxu0 0.0
    %247 = vmatpush2.msra.mxu0 0.0
    %248 = vmatprep.subr.mxu0 0.0
    %249 = vmatpush2.msra.mxu0 0.0
    %250 = vmatprep.subr.mxu0 0.0
    %251 = vmatpush2.msra.mxu0 0.0
    %252 = vmatprep.subr.mxu0 0.0
    %253 = vmatpush2.msra.mxu0 0.0
    %254 = vmatprep.subr.mxu0 0.0
    %255 = vmatpush2.msra.mxu0 0.0
    %256 = vmatprep.subr.mxu0 0.0
    %257 = vmatpush2.msra.mxu0 0.0
    %258 = vmatprep.subr.mxu0 0.0
    %259 = vmatpush2.msra.mxu0 0.0
    %260 = vmatprep.subr.mxu0 0.0
    %261 = vmatpush2.msra.mxu0 0.0
    %262 = vmatprep.subr.mxu0 0.0
    %263 = vmatpush2.msra.mxu0 0.0
    %264 = vmatprep.subr.mxu0 0.0
    %265 = vmatpush2.msra.mxu0 0.0
    %266 = vmatprep.subr.mxu0 0.0
    %267 = vmatpush2.msra.mxu0 0.0
    %268 = vmatprep.subr.mxu0 0.0
    %269 = vmatpush2.msra.mxu0 0.0
    %270 = vmatprep.mubr.f32.mxu0 0.0
    %271 = vmatmul.mubr.f32.gmra.mxu0 %v194
    %v272 = vpop.f32.mrf.mxu0
    %v273 = vadd.f32 0.0, %v272
    %v274 = vpop.f32.mrf.mxu0
    %275 = vmatprep.mubr.f32.mxu0 0.0
    %276 = vmatmul.mubr.f32.gmra.mxu0 %v196
    %v277 = vpop.f32.mrf.mxu0
    %v278 = vadd.f32 0.0, %v277
    %v279 = vpop.f32.mrf.mxu0
    %280 = vmatprep.mubr.f32.mxu0 0.0
    %281 = vmatmul.mubr.f32.gmra.mxu0 %v198
    %v282 = vpop.f32.mrf.mxu0
    %v283 = vadd.f32 0.0, %v282
    %v284 = vpop.f32.mrf.mxu0
    %285 = vmatprep.mubr.f32.mxu0 0.0
    %286 = vmatmul.mubr.f32.gmra.mxu0 %v200
    %v287 = vpop.f32.mrf.mxu0
    %v288 = vadd.f32 0.0, %v287
    %v289 = vpop.f32.mrf.mxu0
    %290 = vmatprep.mubr.f32.mxu0 0.0
    %291 = vmatmul.mubr.f32.gmra.mxu0 %v202
    %v292 = vpop.f32.mrf.mxu0
    %v293 = vadd.f32 0.0, %v292
    %v294 = vpop.f32.mrf.mxu0
    %295 = vmatprep.mubr.f32.mxu0 0.0
    %296 = vmatmul.mubr.f32.gmra.mxu0 %v204
    %v297 = vpop.f32.mrf.mxu0
    %v298 = vadd.f32 0.0, %v297
    %v299 = vpop.f32.mrf.mxu0
    %300 = vdwg.mxu0
    %v301 = vadd.f32 %v273, %v74
    %v302 = vadd.f32 %v278, %v79
    %v303 = vadd.f32 %v283, %v84
    %v304 = vadd.f32 %v288, %v89
    %v305 = vadd.f32 %v293, %v94
    %v306 = vadd.f32 %v298, %v99
    %v307 = vlaneseq
    %v308 = vshrl.u32 %v307, 7
    %v309 = vsub.s32 1, %v308
    %v310 = vrot.slane %v47, %v309
    %vm311 = vcmp.eq.s32.totalorder %v49, %v310
    %vm312 = vcmp.eq.s32.totalorder %v50, %v310
    %v313 = vsel %vm311, 1, 0
    %v314 = vsel %vm312, 1, 0
    %v315 = vcvt.s32.f32 %v313
    %v316 = vcvt.s32.f32 %v314
    %317 = vmatprep.subr.mxu0 0.0
    %318 = vmatpush1.msra.mxu0 0.0
    %319 = vmatprep.subr.mxu0 0.0
    %320 = vmatpush1.msra.mxu0 0.0
    %321 = vmatprep.subr.mxu0 0.0
    %322 = vmatpush1.msra.mxu0 0.0
    %323 = vmatprep.subr.mxu0 0.0
    %324 = vmatpush1.msra.mxu0 0.0
    %325 = vmatprep.subr.mxu0 0.0
    %326 = vmatpush1.msra.mxu0 0.0
    %327 = vmatprep.subr.mxu0 0.0
    %328 = vmatpush1.msra.mxu0 0.0
    %329 = vmatprep.subr.mxu0 0.0
    %330 = vmatpush1.msra.mxu0 0.0
    %331 = vmatprep.subr.mxu0 0.0
    %332 = vmatpush1.msra.mxu0 0.0
    %333 = vmatprep.subr.mxu0 0.0
    %334 = vmatpush1.msra.mxu0 0.0
    %335 = vmatprep.subr.mxu0 0.0
    %336 = vmatpush1.msra.mxu0 0.0
    %337 = vmatprep.subr.mxu0 0.0
    %338 = vmatpush1.msra.mxu0 0.0
    %339 = vmatprep.subr.mxu0 0.0
    %340 = vmatpush1.msra.mxu0 0.0
    %341 = vmatprep.subr.mxu0 0.0
    %342 = vmatpush1.msra.mxu0 0.0
    %343 = vmatprep.subr.mxu0 0.0
    %344 = vmatpush1.msra.mxu0 0.0
    %345 = vmatprep.subr.mxu0 0.0
    %346 = vmatpush1.msra.mxu0 %v316
    %347 = vmatprep.subr.mxu0 0.0
    %348 = vmatpush1.msra.mxu0 %v315
    %349 = vmatprep.subr.mxu0 0.0
    %350 = vmatpush2.msra.mxu0 0.0
    %351 = vmatprep.subr.mxu0 0.0
    %352 = vmatpush2.msra.mxu0 0.0
    %353 = vmatprep.subr.mxu0 0.0
    %354 = vmatpush2.msra.mxu0 0.0
    %355 = vmatprep.subr.mxu0 0.0
    %356 = vmatpush2.msra.mxu0 0.0
    %357 = vmatprep.subr.mxu0 0.0
    %358 = vmatpush2.msra.mxu0 0.0
    %359 = vmatprep.subr.mxu0 0.0
    %360 = vmatpush2.msra.mxu0 0.0
    %361 = vmatprep.subr.mxu0 0.0
    %362 = vmatpush2.msra.mxu0 0.0
    %363 = vmatprep.subr.mxu0 0.0
    %364 = vmatpush2.msra.mxu0 0.0
    %365 = vmatprep.subr.mxu0 0.0
    %366 = vmatpush2.msra.mxu0 0.0
    %367 = vmatprep.subr.mxu0 0.0
    %368 = vmatpush2.msra.mxu0 0.0
    %369 = vmatprep.subr.mxu0 0.0
    %370 = vmatpush2.msra.mxu0 0.0
    %371 = vmatprep.subr.mxu0 0.0
    %372 = vmatpush2.msra.mxu0 0.0
    %373 = vmatprep.subr.mxu0 0.0
    %374 = vmatpush2.msra.mxu0 0.0
    %375 = vmatprep.subr.mxu0 0.0
    %376 = vmatpush2.msra.mxu0 0.0
    %377 = vmatprep.subr.mxu0 0.0
    %378 = vmatpush2.msra.mxu0 0.0
    %379 = vmatprep.subr.mxu0 0.0
    %380 = vmatpush2.msra.mxu0 0.0
    %381 = vmatprep.mubr.f32.mxu0 0.0
    %382 = vmatmul.mubr.f32.gmra.mxu0 %v121
    %v383 = vpop.f32.mrf.mxu0
    %v384 = vadd.f32 0.0, %v383
    %v385 = vpop.f32.mrf.mxu0
    %386 = vdwg.mxu0
    %387 = vmatprep.subr.mxu0 0.0
    %388 = vmatpush1.msra.mxu0 0.0
    %389 = vmatprep.subr.mxu0 0.0
    %390 = vmatpush1.msra.mxu0 0.0
    %391 = vmatprep.subr.mxu0 0.0
    %392 = vmatpush1.msra.mxu0 0.0
    %393 = vmatprep.subr.mxu0 0.0
    %394 = vmatpush1.msra.mxu0 0.0
    %395 = vmatprep.subr.mxu0 0.0
    %396 = vmatpush1.msra.mxu0 0.0
    %397 = vmatprep.subr.mxu0 0.0
    %398 = vmatpush1.msra.mxu0 0.0
    %399 = vmatprep.subr.mxu0 0.0
    %400 = vmatpush1.msra.mxu0 0.0
    %401 = vmatprep.subr.mxu0 0.0
    %402 = vmatpush1.msra.mxu0 0.0
    %403 = vmatprep.subr.mxu0 0.0
    %404 = vmatpush1.msra.mxu0 0.0
    %405 = vmatprep.subr.mxu0 0.0
    %406 = vmatpush1.msra.mxu0 0.0
    %407 = vmatprep.subr.mxu0 0.0
    %408 = vmatpush1.msra.mxu0 0.0
    %409 = vmatprep.subr.mxu0 0.0
    %410 = vmatpush1.msra.mxu0 0.0
    %411 = vmatprep.subr.mxu0 0.0
    %412 = vmatpush1.msra.mxu0 0.0
    %413 = vmatprep.subr.mxu0 0.0
    %414 = vmatpush1.msra.mxu0 0.0
    %415 = vmatprep.subr.mxu0 0.0
    %416 = vmatpush1.msra.mxu0 0.0
    %417 = vmatprep.subr.mxu0 0.0
    %418 = vmatpush1.msra.mxu0 %v384
    %419 = vmatprep.subr.mxu0 0.0
    %420 = vmatpush2.msra.mxu0 0.0
    %421 = vmatprep.subr.mxu0 0.0
    %422 = vmatpush2.msra.mxu0 0.0
    %423 = vmatprep.subr.mxu0 0.0
    %424 = vmatpush2.msra.mxu0 0.0
    %425 = vmatprep.subr.mxu0 0.0
    %426 = vmatpush2.msra.mxu0 0.0
    %427 = vmatprep.subr.mxu0 0.0
    %428 = vmatpush2.msra.mxu0 0.0
    %429 = vmatprep.subr.mxu0 0.0
    %430 = vmatpush2.msra.mxu0 0.0
    %431 = vmatprep.subr.mxu0 0.0
    %432 = vmatpush2.msra.mxu0 0.0
    %433 = vmatprep.subr.mxu0 0.0
    %434 = vmatpush2.msra.mxu0 0.0
    %435 = vmatprep.subr.mxu0 0.0
    %436 = vmatpush2.msra.mxu0 0.0
    %437 = vmatprep.subr.mxu0 0.0
    %438 = vmatpush2.msra.mxu0 0.0
    %439 = vmatprep.subr.mxu0 0.0
    %440 = vmatpush2.msra.mxu0 0.0
    %441 = vmatprep.subr.mxu0 0.0
    %442 = vmatpush2.msra.mxu0 0.0
    %443 = vmatprep.subr.mxu0 0.0
    %444 = vmatpush2.msra.mxu0 0.0
    %445 = vmatprep.subr.mxu0 0.0
    %446 = vmatpush2.msra.mxu0 0.0
    %447 = vmatprep.subr.mxu0 0.0
    %448 = vmatpush2.msra.mxu0 0.0
    %449 = vmatprep.subr.mxu0 0.0
    %450 = vmatpush2.msra.mxu0 0.0
    %451 = vmatprep.mubr.f32.mxu0 0.0
    %452 = vmatmul.mubr.f32.gmra.mxu0 %v194
    %v453 = vpop.f32.mrf.mxu0
    %v454 = vadd.f32 0.0, %v453
    %v455 = vpop.f32.mrf.mxu0
    %456 = vmatprep.mubr.f32.mxu0 0.0
    %457 = vmatmul.mubr.f32.gmra.mxu0 %v196
    %v458 = vpop.f32.mrf.mxu0
    %v459 = vadd.f32 0.0, %v458
    %v460 = vpop.f32.mrf.mxu0
    %461 = vmatprep.mubr.f32.mxu0 0.0
    %462 = vmatmul.mubr.f32.gmra.mxu0 %v198
    %v463 = vpop.f32.mrf.mxu0
    %v464 = vadd.f32 0.0, %v463
    %v465 = vpop.f32.mrf.mxu0
    %466 = vmatprep.mubr.f32.mxu0 0.0
    %467 = vmatmul.mubr.f32.gmra.mxu0 %v200
    %v468 = vpop.f32.mrf.mxu0
    %v469 = vadd.f32 0.0, %v468
    %v470 = vpop.f32.mrf.mxu0
    %471 = vmatprep.mubr.f32.mxu0 0.0
    %472 = vmatmul.mubr.f32.gmra.mxu0 %v202
    %v473 = vpop.f32.mrf.mxu0
    %v474 = vadd.f32 0.0, %v473
    %v475 = vpop.f32.mrf.mxu0
    %476 = vmatprep.mubr.f32.mxu0 0.0
    %477 = vmatmul.mubr.f32.gmra.mxu0 %v204
    %v478 = vpop.f32.mrf.mxu0
    %v479 = vadd.f32 0.0, %v478
    %v480 = vpop.f32.mrf.mxu0
    %481 = vdwg.mxu0
    %v482 = vadd.f32 %v454, %v74
    %v483 = vadd.f32 %v459, %v79
    %v484 = vadd.f32 %v464, %v84
    %v485 = vadd.f32 %v469, %v89
    %v486 = vadd.f32 %v474, %v94
    %v487 = vadd.f32 %v479, %v99
    %v488 = vlaneseq
    %v489 = vshrl.u32 %v488, 7
    %v490 = vsub.s32 2, %v489
    %v491 = vrot.slane %v47, %v490
    %vm492 = vcmp.eq.s32.totalorder %v49, %v491
    %vm493 = vcmp.eq.s32.totalorder %v50, %v491
    %v494 = vsel %vm492, 1, 0
    %v495 = vsel %vm493, 1, 0
    %v496 = vcvt.s32.f32 %v494
    %v497 = vcvt.s32.f32 %v495
    %498 = vmatprep.subr.mxu0 0.0
    %499 = vmatpush1.msra.mxu0 0.0
    %500 = vmatprep.subr.mxu0 0.0
    %501 = vmatpush1.msra.mxu0 0.0
    %502 = vmatprep.subr.mxu0 0.0
    %503 = vmatpush1.msra.mxu0 0.0
    %504 = vmatprep.subr.mxu0 0.0
    %505 = vmatpush1.msra.mxu0 0.0
    %506 = vmatprep.subr.mxu0 0.0
    %507 = vmatpush1.msra.mxu0 0.0
    %508 = vmatprep.subr.mxu0 0.0
    %509 = vmatpush1.msra.mxu0 0.0
    %510 = vmatprep.subr.mxu0 0.0
    %511 = vmatpush1.msra.mxu0 0.0
    %512 = vmatprep.subr.mxu0 0.0
    %513 = vmatpush1.msra.mxu0 0.0
    %514 = vmatprep.subr.mxu0 0.0
    %515 = vmatpush1.msra.mxu0 0.0
    %516 = vmatprep.subr.mxu0 0.0
    %517 = vmatpush1.msra.mxu0 0.0
    %518 = vmatprep.subr.mxu0 0.0
    %519 = vmatpush1.msra.mxu0 0.0
    %520 = vmatprep.subr.mxu0 0.0
    %521 = vmatpush1.msra.mxu0 0.0
    %522 = vmatprep.subr.mxu0 0.0
    %523 = vmatpush1.msra.mxu0 0.0
    %524 = vmatprep.subr.mxu0 0.0
    %525 = vmatpush1.msra.mxu0 0.0
    %526 = vmatprep.subr.mxu0 0.0
    %527 = vmatpush1.msra.mxu0 %v497
    %528 = vmatprep.subr.mxu0 0.0
    %529 = vmatpush1.msra.mxu0 %v496
    %530 = vmatprep.subr.mxu0 0.0
    %531 = vmatpush2.msra.mxu0 0.0
    %532 = vmatprep.subr.mxu0 0.0
    %533 = vmatpush2.msra.mxu0 0.0
    %534 = vmatprep.subr.mxu0 0.0
    %535 = vmatpush2.msra.mxu0 0.0
    %536 = vmatprep.subr.mxu0 0.0
    %537 = vmatpush2.msra.mxu0 0.0
    %538 = vmatprep.subr.mxu0 0.0
    %539 = vmatpush2.msra.mxu0 0.0
    %540 = vmatprep.subr.mxu0 0.0
    %541 = vmatpush2.msra.mxu0 0.0
    %542 = vmatprep.subr.mxu0 0.0
    %543 = vmatpush2.msra.mxu0 0.0
    %544 = vmatprep.subr.mxu0 0.0
    %545 = vmatpush2.msra.mxu0 0.0
    %546 = vmatprep.subr.mxu0 0.0
    %547 = vmatpush2.msra.mxu0 0.0
    %548 = vmatprep.subr.mxu0 0.0
    %549 = vmatpush2.msra.mxu0 0.0
    %550 = vmatprep.subr.mxu0 0.0
    %551 = vmatpush2.msra.mxu0 0.0
    %552 = vmatprep.subr.mxu0 0.0
    %553 = vmatpush2.msra.mxu0 0.0
    %554 = vmatprep.subr.mxu0 0.0
    %555 = vmatpush2.msra.mxu0 0.0
    %556 = vmatprep.subr.mxu0 0.0
    %557 = vmatpush2.msra.mxu0 0.0
    %558 = vmatprep.subr.mxu0 0.0
    %559 = vmatpush2.msra.mxu0 0.0
    %560 = vmatprep.subr.mxu0 0.0
    %561 = vmatpush2.msra.mxu0 0.0
    %562 = vmatprep.mubr.f32.mxu0 0.0
    %563 = vmatmul.mubr.f32.gmra.mxu0 %v121
    %v564 = vpop.f32.mrf.mxu0
    %v565 = vadd.f32 0.0, %v564
    %v566 = vpop.f32.mrf.mxu0
    %567 = vdwg.mxu0
    %568 = vmatprep.subr.mxu0 0.0
    %569 = vmatpush1.msra.mxu0 0.0
    %570 = vmatprep.subr.mxu0 0.0
    %571 = vmatpush1.msra.mxu0 0.0
    %572 = vmatprep.subr.mxu0 0.0
    %573 = vmatpush1.msra.mxu0 0.0
    %574 = vmatprep.subr.mxu0 0.0
    %575 = vmatpush1.msra.mxu0 0.0
    %576 = vmatprep.subr.mxu0 0.0
    %577 = vmatpush1.msra.mxu0 0.0
    %578 = vmatprep.subr.mxu0 0.0
    %579 = vmatpush1.msra.mxu0 0.0
    %580 = vmatprep.subr.mxu0 0.0
    %581 = vmatpush1.msra.mxu0 0.0
    %582 = vmatprep.subr.mxu0 0.0
    %583 = vmatpush1.msra.mxu0 0.0
    %584 = vmatprep.subr.mxu0 0.0
    %585 = vmatpush1.msra.mxu0 0.0
    %586 = vmatprep.subr.mxu0 0.0
    %587 = vmatpush1.msra.mxu0 0.0
    %588 = vmatprep.subr.mxu0 0.0
    %589 = vmatpush1.msra.mxu0 0.0
    %590 = vmatprep.subr.mxu0 0.0
    %591 = vmatpush1.msra.mxu0 0.0
    %592 = vmatprep.subr.mxu0 0.0
    %593 = vmatpush1.msra.mxu0 0.0
    %594 = vmatprep.subr.mxu0 0.0
    %595 = vmatpush1.msra.mxu0 0.0
    %596 = vmatprep.subr.mxu0 0.0
    %597 = vmatpush1.msra.mxu0 0.0
    %598 = vmatprep.subr.mxu0 0.0
    %599 = vmatpush1.msra.mxu0 %v565
    %600 = vmatprep.subr.mxu0 0.0
    %601 = vmatpush2.msra.mxu0 0.0
    %602 = vmatprep.subr.mxu0 0.0
    %603 = vmatpush2.msra.mxu0 0.0
    %604 = vmatprep.subr.mxu0 0.0
    %605 = vmatpush2.msra.mxu0 0.0
    %606 = vmatprep.subr.mxu0 0.0
    %607 = vmatpush2.msra.mxu0 0.0
    %608 = vmatprep.subr.mxu0 0.0
    %609 = vmatpush2.msra.mxu0 0.0
    %610 = vmatprep.subr.mxu0 0.0
    %611 = vmatpush2.msra.mxu0 0.0
    %612 = vmatprep.subr.mxu0 0.0
    %613 = vmatpush2.msra.mxu0 0.0
    %614 = vmatprep.subr.mxu0 0.0
    %615 = vmatpush2.msra.mxu0 0.0
    %616 = vmatprep.subr.mxu0 0.0
    %617 = vmatpush2.msra.mxu0 0.0
    %618 = vmatprep.subr.mxu0 0.0
    %619 = vmatpush2.msra.mxu0 0.0
    %620 = vmatprep.subr.mxu0 0.0
    %621 = vmatpush2.msra.mxu0 0.0
    %622 = vmatprep.subr.mxu0 0.0
    %623 = vmatpush2.msra.mxu0 0.0
    %624 = vmatprep.subr.mxu0 0.0
    %625 = vmatpush2.msra.mxu0 0.0
    %626 = vmatprep.subr.mxu0 0.0
    %627 = vmatpush2.msra.mxu0 0.0
    %628 = vmatprep.subr.mxu0 0.0
    %629 = vmatpush2.msra.mxu0 0.0
    %630 = vmatprep.subr.mxu0 0.0
    %631 = vmatpush2.msra.mxu0 0.0
    %632 = vmatprep.mubr.f32.mxu0 0.0
    %633 = vmatmul.mubr.f32.gmra.mxu0 %v194
    %v634 = vpop.f32.mrf.mxu0
    %v635 = vadd.f32 0.0, %v634
    %v636 = vpop.f32.mrf.mxu0
    %637 = vmatprep.mubr.f32.mxu0 0.0
    %638 = vmatmul.mubr.f32.gmra.mxu0 %v196
    %v639 = vpop.f32.mrf.mxu0
    %v640 = vadd.f32 0.0, %v639
    %v641 = vpop.f32.mrf.mxu0
    %642 = vmatprep.mubr.f32.mxu0 0.0
    %643 = vmatmul.mubr.f32.gmra.mxu0 %v198
    %v644 = vpop.f32.mrf.mxu0
    %v645 = vadd.f32 0.0, %v644
    %v646 = vpop.f32.mrf.mxu0
    %647 = vmatprep.mubr.f32.mxu0 0.0
    %648 = vmatmul.mubr.f32.gmra.mxu0 %v200
    %v649 = vpop.f32.mrf.mxu0
    %v650 = vadd.f32 0.0, %v649
    %v651 = vpop.f32.mrf.mxu0
    %652 = vmatprep.mubr.f32.mxu0 0.0
    %653 = vmatmul.mubr.f32.gmra.mxu0 %v202
    %v654 = vpop.f32.mrf.mxu0
    %v655 = vadd.f32 0.0, %v654
    %v656 = vpop.f32.mrf.mxu0
    %657 = vmatprep.mubr.f32.mxu0 0.0
    %658 = vmatmul.mubr.f32.gmra.mxu0 %v204
    %v659 = vpop.f32.mrf.mxu0
    %v660 = vadd.f32 0.0, %v659
    %v661 = vpop.f32.mrf.mxu0
    %662 = vdwg.mxu0
    %v663 = vadd.f32 %v635, %v74
    %v664 = vadd.f32 %v640, %v79
    %v665 = vadd.f32 %v645, %v84
    %v666 = vadd.f32 %v650, %v89
    %v667 = vadd.f32 %v655, %v94
    %v668 = vadd.f32 %v660, %v99
    %v669 = vlaneseq
    %v670 = vshrl.u32 %v669, 7
    %v671 = vsub.s32 3, %v670
    %v672 = vrot.slane %v47, %v671
    %vm673 = vcmp.eq.s32.totalorder %v49, %v672
    %vm674 = vcmp.eq.s32.totalorder %v50, %v672
    %v675 = vsel %vm673, 1, 0
    %v676 = vsel %vm674, 1, 0
    %v677 = vcvt.s32.f32 %v675
    %v678 = vcvt.s32.f32 %v676
    %679 = vmatprep.subr.mxu0 0.0
    %680 = vmatpush1.msra.mxu0 0.0
    %681 = vmatprep.subr.mxu0 0.0
    %682 = vmatpush1.msra.mxu0 0.0
    %683 = vmatprep.subr.mxu0 0.0
    %684 = vmatpush1.msra.mxu0 0.0
    %685 = vmatprep.subr.mxu0 0.0
    %686 = vmatpush1.msra.mxu0 0.0
    %687 = vmatprep.subr.mxu0 0.0
    %688 = vmatpush1.msra.mxu0 0.0
    %689 = vmatprep.subr.mxu0 0.0
    %690 = vmatpush1.msra.mxu0 0.0
    %691 = vmatprep.subr.mxu0 0.0
    %692 = vmatpush1.msra.mxu0 0.0
    %693 = vmatprep.subr.mxu0 0.0
    %694 = vmatpush1.msra.mxu0 0.0
    %695 = vmatprep.subr.mxu0 0.0
    %696 = vmatpush1.msra.mxu0 0.0
    %697 = vmatprep.subr.mxu0 0.0
    %698 = vmatpush1.msra.mxu0 0.0
    %699 = vmatprep.subr.mxu0 0.0
    %700 = vmatpush1.msra.mxu0 0.0
    %701 = vmatprep.subr.mxu0 0.0
    %702 = vmatpush1.msra.mxu0 0.0
    %703 = vmatprep.subr.mxu0 0.0
    %704 = vmatpush1.msra.mxu0 0.0
    %705 = vmatprep.subr.mxu0 0.0
    %706 = vmatpush1.msra.mxu0 0.0
    %707 = vmatprep.subr.mxu0 0.0
    %708 = vmatpush1.msra.mxu0 %v678
    %709 = vmatprep.subr.mxu0 0.0
    %710 = vmatpush1.msra.mxu0 %v677
    %711 = vmatprep.subr.mxu0 0.0
    %712 = vmatpush2.msra.mxu0 0.0
    %713 = vmatprep.subr.mxu0 0.0
    %714 = vmatpush2.msra.mxu0 0.0
    %715 = vmatprep.subr.mxu0 0.0
    %716 = vmatpush2.msra.mxu0 0.0
    %717 = vmatprep.subr.mxu0 0.0
    %718 = vmatpush2.msra.mxu0 0.0
    %719 = vmatprep.subr.mxu0 0.0
    %720 = vmatpush2.msra.mxu0 0.0
    %721 = vmatprep.subr.mxu0 0.0
    %722 = vmatpush2.msra.mxu0 0.0
    %723 = vmatprep.subr.mxu0 0.0
    %724 = vmatpush2.msra.mxu0 0.0
    %725 = vmatprep.subr.mxu0 0.0
    %726 = vmatpush2.msra.mxu0 0.0
    %727 = vmatprep.subr.mxu0 0.0
    %728 = vmatpush2.msra.mxu0 0.0
    %729 = vmatprep.subr.mxu0 0.0
    %730 = vmatpush2.msra.mxu0 0.0
    %731 = vmatprep.subr.mxu0 0.0
    %732 = vmatpush2.msra.mxu0 0.0
    %733 = vmatprep.subr.mxu0 0.0
    %734 = vmatpush2.msra.mxu0 0.0
    %735 = vmatprep.subr.mxu0 0.0
    %736 = vmatpush2.msra.mxu0 0.0
    %737 = vmatprep.subr.mxu0 0.0
    %738 = vmatpush2.msra.mxu0 0.0
    %739 = vmatprep.subr.mxu0 0.0
    %740 = vmatpush2.msra.mxu0 0.0
    %741 = vmatprep.subr.mxu0 0.0
    %742 = vmatpush2.msra.mxu0 0.0
    %743 = vmatprep.mubr.f32.mxu0 0.0
    %744 = vmatmul.mubr.f32.gmra.mxu0 %v121
    %v745 = vpop.f32.mrf.mxu0
    %v746 = vadd.f32 0.0, %v745
    %v747 = vpop.f32.mrf.mxu0
    %748 = vdwg.mxu0
    %749 = vmatprep.subr.mxu0 0.0
    %750 = vmatpush1.msra.mxu0 0.0
    %751 = vmatprep.subr.mxu0 0.0
    %752 = vmatpush1.msra.mxu0 0.0
    %753 = vmatprep.subr.mxu0 0.0
    %754 = vmatpush1.msra.mxu0 0.0
    %755 = vmatprep.subr.mxu0 0.0
    %756 = vmatpush1.msra.mxu0 0.0
    %757 = vmatprep.subr.mxu0 0.0
    %758 = vmatpush1.msra.mxu0 0.0
    %759 = vmatprep.subr.mxu0 0.0
    %760 = vmatpush1.msra.mxu0 0.0
    %761 = vmatprep.subr.mxu0 0.0
    %762 = vmatpush1.msra.mxu0 0.0
    %763 = vmatprep.subr.mxu0 0.0
    %764 = vmatpush1.msra.mxu0 0.0
    %765 = vmatprep.subr.mxu0 0.0
    %766 = vmatpush1.msra.mxu0 0.0
    %767 = vmatprep.subr.mxu0 0.0
    %768 = vmatpush1.msra.mxu0 0.0
    %769 = vmatprep.subr.mxu0 0.0
    %770 = vmatpush1.msra.mxu0 0.0
    %771 = vmatprep.subr.mxu0 0.0
    %772 = vmatpush1.msra.mxu0 0.0
    %773 = vmatprep.subr.mxu0 0.0
    %774 = vmatpush1.msra.mxu0 0.0
    %775 = vmatprep.subr.mxu0 0.0
    %776 = vmatpush1.msra.mxu0 0.0
    %777 = vmatprep.subr.mxu0 0.0
    %778 = vmatpush1.msra.mxu0 0.0
    %779 = vmatprep.subr.mxu0 0.0
    %780 = vmatpush1.msra.mxu0 %v746
    %781 = vmatprep.subr.mxu0 0.0
    %782 = vmatpush2.msra.mxu0 0.0
    %783 = vmatprep.subr.mxu0 0.0
    %784 = vmatpush2.msra.mxu0 0.0
    %785 = vmatprep.subr.mxu0 0.0
    %786 = vmatpush2.msra.mxu0 0.0
    %787 = vmatprep.subr.mxu0 0.0
    %788 = vmatpush2.msra.mxu0 0.0
    %789 = vmatprep.subr.mxu0 0.0
    %790 = vmatpush2.msra.mxu0 0.0
    %791 = vmatprep.subr.mxu0 0.0
    %792 = vmatpush2.msra.mxu0 0.0
    %793 = vmatprep.subr.mxu0 0.0
    %794 = vmatpush2.msra.mxu0 0.0
    %795 = vmatprep.subr.mxu0 0.0
    %796 = vmatpush2.msra.mxu0 0.0
    %797 = vmatprep.subr.mxu0 0.0
    %798 = vmatpush2.msra.mxu0 0.0
    %799 = vmatprep.subr.mxu0 0.0
    %800 = vmatpush2.msra.mxu0 0.0
    %801 = vmatprep.subr.mxu0 0.0
    %802 = vmatpush2.msra.mxu0 0.0
    %803 = vmatprep.subr.mxu0 0.0
    %804 = vmatpush2.msra.mxu0 0.0
    %805 = vmatprep.subr.mxu0 0.0
    %806 = vmatpush2.msra.mxu0 0.0
    %807 = vmatprep.subr.mxu0 0.0
    %808 = vmatpush2.msra.mxu0 0.0
    %809 = vmatprep.subr.mxu0 0.0
    %810 = vmatpush2.msra.mxu0 0.0
    %811 = vmatprep.subr.mxu0 0.0
    %812 = vmatpush2.msra.mxu0 0.0
    %813 = vmatprep.mubr.f32.mxu0 0.0
    %814 = vmatmul.mubr.f32.gmra.mxu0 %v194
    %v815 = vpop.f32.mrf.mxu0
    %v816 = vadd.f32 0.0, %v815
    %v817 = vpop.f32.mrf.mxu0
    %818 = vmatprep.mubr.f32.mxu0 0.0
    %819 = vmatmul.mubr.f32.gmra.mxu0 %v196
    %v820 = vpop.f32.mrf.mxu0
    %v821 = vadd.f32 0.0, %v820
    %v822 = vpop.f32.mrf.mxu0
    %823 = vmatprep.mubr.f32.mxu0 0.0
    %824 = vmatmul.mubr.f32.gmra.mxu0 %v198
    %v825 = vpop.f32.mrf.mxu0
    %v826 = vadd.f32 0.0, %v825
    %v827 = vpop.f32.mrf.mxu0
    %828 = vmatprep.mubr.f32.mxu0 0.0
    %829 = vmatmul.mubr.f32.gmra.mxu0 %v200
    %v830 = vpop.f32.mrf.mxu0
    %v831 = vadd.f32 0.0, %v830
    %v832 = vpop.f32.mrf.mxu0
    %833 = vmatprep.mubr.f32.mxu0 0.0
    %834 = vmatmul.mubr.f32.gmra.mxu0 %v202
    %v835 = vpop.f32.mrf.mxu0
    %v836 = vadd.f32 0.0, %v835
    %v837 = vpop.f32.mrf.mxu0
    %838 = vmatprep.mubr.f32.mxu0 0.0
    %839 = vmatmul.mubr.f32.gmra.mxu0 %v204
    %v840 = vpop.f32.mrf.mxu0
    %v841 = vadd.f32 0.0, %v840
    %v842 = vpop.f32.mrf.mxu0
    %843 = vdwg.mxu0
    %v844 = vadd.f32 %v816, %v74
    %v845 = vadd.f32 %v821, %v79
    %v846 = vadd.f32 %v826, %v84
    %v847 = vadd.f32 %v831, %v89
    %v848 = vadd.f32 %v836, %v94
    %v849 = vadd.f32 %v841, %v99
    %v850 = vxor.u32 %v301, 2147483648
    %v851 = vxor.u32 %v302, 2147483648
    %v852 = vxor.u32 %v303, 2147483648
    %v853 = vxor.u32 %v304, 2147483648
    %v854 = vmul.f32 %v850, 1.442695
    %v855 = vpow.pop %v854
    %v856 = vmul.f32 %v851, 1.442695
    %v857 = vpow.pop %v856
    %v858 = vmul.f32 %v852, 1.442695
    %v859 = vpow.pop %v858
    %v860 = vmul.f32 %v853, 1.442695
    %v861 = vpow.pop %v860
    %v862 = vadd.f32 %v855, 1.0
    %v863 = vadd.f32 %v857, 1.0
    %v864 = vadd.f32 %v859, 1.0
    %v865 = vadd.f32 %v861, 1.0
    %v866 = vrcp.pop %v862
    %v867 = vmul.f32 1.0, %v866
    %v868 = vrcp.pop %v863
    %v869 = vmul.f32 1.0, %v868
    %v870 = vrcp.pop %v864
    %v871 = vmul.f32 1.0, %v870
    %v872 = vrcp.pop %v865
    %v873 = vmul.f32 1.0, %v872
    %v874 = vmul.f32 %v867, %v103
    %v875 = vmul.f32 %v869, %v107
    %v876 = vadd.f32 %v305, %v874
    %v877 = vadd.f32 %v306, %v875
    %v878 = vtanh.pop %v876
    %v879 = vtanh.pop %v877
    %v880 = vsub.f32 0.0, %v878
    %v881 = vsub.f32 0.0, %v879
    %v882 = vmul.f32 %v871, %v880
    %v883 = vmul.f32 %v873, %v881
    %v884 = vadd.f32 %v878, %v882
    %v885 = vadd.f32 %v879, %v883
    %886 = vrot.lane.b32.xlu0 %v40, 120
    %v887 = vpop.permute.xlu0 %886
    %888 = vrot.lane.b32.xlu0 %v41, 120
    %v889 = vpop.permute.xlu0 %888
    %890 = vrot.lane.b32.xlu0 %v42, 120
    %v891 = vpop.permute.xlu0 %890
    %892 = vrot.lane.b32.xlu0 %v43, 120
    %v893 = vpop.permute.xlu0 %892
    %894 = vrot.lane.b32.xlu0 %v44, 120
    %v895 = vpop.permute.xlu0 %894
    %896 = vrot.lane.b32.xlu0 %v45, 120
    %v897 = vpop.permute.xlu0 %896
    %v898 = vsel %vm119, %v887, 0
    %v900 = vsel %vm119, %v889, 0
    %v902 = vsel %vm119, %v891, 0
    %v904 = vsel %vm119, %v893, 0
    %v906 = vsel %vm119, %v895, 0
    %v908 = vsel %vm119, %v897, 0
    %910 = vmatprep.subr.mxu0 0.0
    %911 = vmatpush1.msra.mxu0 0.0
    %912 = vmatprep.subr.mxu0 0.0
    %913 = vmatpush1.msra.mxu0 0.0
    %914 = vmatprep.subr.mxu0 0.0
    %915 = vmatpush1.msra.mxu0 0.0
    %916 = vmatprep.subr.mxu0 0.0
    %917 = vmatpush1.msra.mxu0 0.0
    %918 = vmatprep.subr.mxu0 0.0
    %919 = vmatpush1.msra.mxu0 0.0
    %920 = vmatprep.subr.mxu0 0.0
    %921 = vmatpush1.msra.mxu0 0.0
    %922 = vmatprep.subr.mxu0 0.0
    %923 = vmatpush1.msra.mxu0 0.0
    %924 = vmatprep.subr.mxu0 0.0
    %925 = vmatpush1.msra.mxu0 0.0
    %926 = vmatprep.subr.mxu0 0.0
    %927 = vmatpush1.msra.mxu0 0.0
    %928 = vmatprep.subr.mxu0 0.0
    %929 = vmatpush1.msra.mxu0 0.0
    %930 = vmatprep.subr.mxu0 0.0
    %931 = vmatpush1.msra.mxu0 0.0
    %932 = vmatprep.subr.mxu0 0.0
    %933 = vmatpush1.msra.mxu0 0.0
    %934 = vmatprep.subr.mxu0 0.0
    %935 = vmatpush1.msra.mxu0 0.0
    %936 = vmatprep.subr.mxu0 0.0
    %937 = vmatpush1.msra.mxu0 0.0
    %938 = vmatprep.subr.mxu0 0.0
    %939 = vmatpush1.msra.mxu0 %v885
    %940 = vmatprep.subr.mxu0 0.0
    %941 = vmatpush1.msra.mxu0 %v884
    %942 = vmatprep.subr.mxu0 0.0
    %943 = vmatpush2.msra.mxu0 0.0
    %944 = vmatprep.subr.mxu0 0.0
    %945 = vmatpush2.msra.mxu0 0.0
    %946 = vmatprep.subr.mxu0 0.0
    %947 = vmatpush2.msra.mxu0 0.0
    %948 = vmatprep.subr.mxu0 0.0
    %949 = vmatpush2.msra.mxu0 0.0
    %950 = vmatprep.subr.mxu0 0.0
    %951 = vmatpush2.msra.mxu0 0.0
    %952 = vmatprep.subr.mxu0 0.0
    %953 = vmatpush2.msra.mxu0 0.0
    %954 = vmatprep.subr.mxu0 0.0
    %955 = vmatpush2.msra.mxu0 0.0
    %956 = vmatprep.subr.mxu0 0.0
    %957 = vmatpush2.msra.mxu0 0.0
    %958 = vmatprep.subr.mxu0 0.0
    %959 = vmatpush2.msra.mxu0 0.0
    %960 = vmatprep.subr.mxu0 0.0
    %961 = vmatpush2.msra.mxu0 0.0
    %962 = vmatprep.subr.mxu0 0.0
    %963 = vmatpush2.msra.mxu0 0.0
    %964 = vmatprep.subr.mxu0 0.0
    %965 = vmatpush2.msra.mxu0 0.0
    %966 = vmatprep.subr.mxu0 0.0
    %967 = vmatpush2.msra.mxu0 0.0
    %968 = vmatprep.subr.mxu0 0.0
    %969 = vmatpush2.msra.mxu0 0.0
    %970 = vmatprep.subr.mxu0 0.0
    %971 = vmatpush2.msra.mxu0 0.0
    %972 = vmatprep.subr.mxu0 0.0
    %973 = vmatpush2.msra.mxu0 0.0
    %974 = vmatprep.mubr.f32.mxu0 0.0
    %975 = vmatmul.mubr.f32.gmra.mxu0 %v898
    %v976 = vpop.f32.mrf.mxu0
    %v977 = vadd.f32 0.0, %v976
    %v978 = vpop.f32.mrf.mxu0
    %979 = vmatprep.mubr.f32.mxu0 0.0
    %980 = vmatmul.mubr.f32.gmra.mxu0 %v900
    %v981 = vpop.f32.mrf.mxu0
    %v982 = vadd.f32 0.0, %v981
    %v983 = vpop.f32.mrf.mxu0
    %984 = vmatprep.mubr.f32.mxu0 0.0
    %985 = vmatmul.mubr.f32.gmra.mxu0 %v902
    %v986 = vpop.f32.mrf.mxu0
    %v987 = vadd.f32 0.0, %v986
    %v988 = vpop.f32.mrf.mxu0
    %989 = vmatprep.mubr.f32.mxu0 0.0
    %990 = vmatmul.mubr.f32.gmra.mxu0 %v904
    %v991 = vpop.f32.mrf.mxu0
    %v992 = vadd.f32 0.0, %v991
    %v993 = vpop.f32.mrf.mxu0
    %994 = vmatprep.mubr.f32.mxu0 0.0
    %995 = vmatmul.mubr.f32.gmra.mxu0 %v906
    %v996 = vpop.f32.mrf.mxu0
    %v997 = vadd.f32 0.0, %v996
    %v998 = vpop.f32.mrf.mxu0
    %999 = vmatprep.mubr.f32.mxu0 0.0
    %1000 = vmatmul.mubr.f32.gmra.mxu0 %v908
    %v1001 = vpop.f32.mrf.mxu0
    %v1002 = vadd.f32 0.0, %v1001
    %v1003 = vpop.f32.mrf.mxu0
    %1004 = vdwg.mxu0
    %v1005 = vadd.f32 %v482, %v977
    %v1006 = vadd.f32 %v483, %v982
    %v1007 = vadd.f32 %v484, %v987
    %v1008 = vadd.f32 %v485, %v992
    %v1009 = vxor.u32 %v1005, 2147483648
    %v1010 = vxor.u32 %v1006, 2147483648
    %v1011 = vxor.u32 %v1007, 2147483648
    %v1012 = vxor.u32 %v1008, 2147483648
    %v1013 = vmul.f32 %v1009, 1.442695
    %v1014 = vpow.pop %v1013
    %v1015 = vmul.f32 %v1010, 1.442695
    %v1016 = vpow.pop %v1015
    %v1017 = vmul.f32 %v1011, 1.442695
    %v1018 = vpow.pop %v1017
    %v1019 = vmul.f32 %v1012, 1.442695
    %v1020 = vpow.pop %v1019
    %v1021 = vadd.f32 %v1014, 1.0
    %v1022 = vadd.f32 %v1016, 1.0
    %v1023 = vadd.f32 %v1018, 1.0
    %v1024 = vadd.f32 %v1020, 1.0
    %v1025 = vrcp.pop %v1021
    %v1026 = vmul.f32 1.0, %v1025
    %v1027 = vrcp.pop %v1022
    %v1028 = vmul.f32 1.0, %v1027
    %v1029 = vrcp.pop %v1023
    %v1030 = vmul.f32 1.0, %v1029
    %v1031 = vrcp.pop %v1024
    %v1032 = vmul.f32 1.0, %v1031
    %v1033 = vadd.f32 %v997, %v103
    %v1034 = vadd.f32 %v1002, %v107
    %v1035 = vmul.f32 %v1026, %v1033
    %v1036 = vmul.f32 %v1028, %v1034
    %v1037 = vadd.f32 %v486, %v1035
    %v1038 = vadd.f32 %v487, %v1036
    %v1039 = vtanh.pop %v1037
    %v1040 = vtanh.pop %v1038
    %v1041 = vsub.f32 %v884, %v1039
    %v1042 = vsub.f32 %v885, %v1040
    %v1043 = vmul.f32 %v1030, %v1041
    %v1044 = vmul.f32 %v1032, %v1042
    %v1045 = vadd.f32 %v1039, %v1043
    %v1046 = vadd.f32 %v1040, %v1044
    %1047 = vmatprep.subr.mxu0 0.0
    %1048 = vmatpush1.msra.mxu0 0.0
    %1049 = vmatprep.subr.mxu0 0.0
    %1050 = vmatpush1.msra.mxu0 0.0
    %1051 = vmatprep.subr.mxu0 0.0
    %1052 = vmatpush1.msra.mxu0 0.0
    %1053 = vmatprep.subr.mxu0 0.0
    %1054 = vmatpush1.msra.mxu0 0.0
    %1055 = vmatprep.subr.mxu0 0.0
    %1056 = vmatpush1.msra.mxu0 0.0
    %1057 = vmatprep.subr.mxu0 0.0
    %1058 = vmatpush1.msra.mxu0 0.0
    %1059 = vmatprep.subr.mxu0 0.0
    %1060 = vmatpush1.msra.mxu0 0.0
    %1061 = vmatprep.subr.mxu0 0.0
    %1062 = vmatpush1.msra.mxu0 0.0
    %1063 = vmatprep.subr.mxu0 0.0
    %1064 = vmatpush1.msra.mxu0 0.0
    %1065 = vmatprep.subr.mxu0 0.0
    %1066 = vmatpush1.msra.mxu0 0.0
    %1067 = vmatprep.subr.mxu0 0.0
    %1068 = vmatpush1.msra.mxu0 0.0
    %1069 = vmatprep.subr.mxu0 0.0
    %1070 = vmatpush1.msra.mxu0 0.0
    %1071 = vmatprep.subr.mxu0 0.0
    %1072 = vmatpush1.msra.mxu0 0.0
    %1073 = vmatprep.subr.mxu0 0.0
    %1074 = vmatpush1.msra.mxu0 0.0
    %1075 = vmatprep.subr.mxu0 0.0
    %1076 = vmatpush1.msra.mxu0 %v1046
    %1077 = vmatprep.subr.mxu0 0.0
    %1078 = vmatpush1.msra.mxu0 %v1045
    %1079 = vmatprep.subr.mxu0 0.0
    %1080 = vmatpush2.msra.mxu0 0.0
    %1081 = vmatprep.subr.mxu0 0.0
    %1082 = vmatpush2.msra.mxu0 0.0
    %1083 = vmatprep.subr.mxu0 0.0
    %1084 = vmatpush2.msra.mxu0 0.0
    %1085 = vmatprep.subr.mxu0 0.0
    %1086 = vmatpush2.msra.mxu0 0.0
    %1087 = vmatprep.subr.mxu0 0.0
    %1088 = vmatpush2.msra.mxu0 0.0
    %1089 = vmatprep.subr.mxu0 0.0
    %1090 = vmatpush2.msra.mxu0 0.0
    %1091 = vmatprep.subr.mxu0 0.0
    %1092 = vmatpush2.msra.mxu0 0.0
    %1093 = vmatprep.subr.mxu0 0.0
    %1094 = vmatpush2.msra.mxu0 0.0
    %1095 = vmatprep.subr.mxu0 0.0
    %1096 = vmatpush2.msra.mxu0 0.0
    %1097 = vmatprep.subr.mxu0 0.0
    %1098 = vmatpush2.msra.mxu0 0.0
    %1099 = vmatprep.subr.mxu0 0.0
    %1100 = vmatpush2.msra.mxu0 0.0
    %1101 = vmatprep.subr.mxu0 0.0
    %1102 = vmatpush2.msra.mxu0 0.0
    %1103 = vmatprep.subr.mxu0 0.0
    %1104 = vmatpush2.msra.mxu0 0.0
    %1105 = vmatprep.subr.mxu0 0.0
    %1106 = vmatpush2.msra.mxu0 0.0
    %1107 = vmatprep.subr.mxu0 0.0
    %1108 = vmatpush2.msra.mxu0 0.0
    %1109 = vmatprep.subr.mxu0 0.0
    %1110 = vmatpush2.msra.mxu0 0.0
    %1111 = vmatprep.mubr.f32.mxu0 0.0
    %1112 = vmatmul.mubr.f32.gmra.mxu0 %v898
    %v1113 = vpop.f32.mrf.mxu0
    %v1114 = vadd.f32 0.0, %v1113
    %v1115 = vpop.f32.mrf.mxu0
    %1116 = vmatprep.mubr.f32.mxu0 0.0
    %1117 = vmatmul.mubr.f32.gmra.mxu0 %v900
    %v1118 = vpop.f32.mrf.mxu0
    %v1119 = vadd.f32 0.0, %v1118
    %v1120 = vpop.f32.mrf.mxu0
    %1121 = vmatprep.mubr.f32.mxu0 0.0
    %1122 = vmatmul.mubr.f32.gmra.mxu0 %v902
    %v1123 = vpop.f32.mrf.mxu0
    %v1124 = vadd.f32 0.0, %v1123
    %v1125 = vpop.f32.mrf.mxu0
    %1126 = vmatprep.mubr.f32.mxu0 0.0
    %1127 = vmatmul.mubr.f32.gmra.mxu0 %v904
    %v1128 = vpop.f32.mrf.mxu0
    %v1129 = vadd.f32 0.0, %v1128
    %v1130 = vpop.f32.mrf.mxu0
    %1131 = vmatprep.mubr.f32.mxu0 0.0
    %1132 = vmatmul.mubr.f32.gmra.mxu0 %v906
    %v1133 = vpop.f32.mrf.mxu0
    %v1134 = vadd.f32 0.0, %v1133
    %v1135 = vpop.f32.mrf.mxu0
    %1136 = vmatprep.mubr.f32.mxu0 0.0
    %1137 = vmatmul.mubr.f32.gmra.mxu0 %v908
    %v1138 = vpop.f32.mrf.mxu0
    %v1139 = vadd.f32 0.0, %v1138
    %v1140 = vpop.f32.mrf.mxu0
    %1141 = vdwg.mxu0
    %v1142 = vadd.f32 %v663, %v1114
    %v1143 = vadd.f32 %v664, %v1119
    %v1144 = vadd.f32 %v665, %v1124
    %v1145 = vadd.f32 %v666, %v1129
    %v1146 = vxor.u32 %v1142, 2147483648
    %v1147 = vxor.u32 %v1143, 2147483648
    %v1148 = vxor.u32 %v1144, 2147483648
    %v1149 = vxor.u32 %v1145, 2147483648
    %v1150 = vmul.f32 %v1146, 1.442695
    %v1151 = vpow.pop %v1150
    %v1152 = vmul.f32 %v1147, 1.442695
    %v1153 = vpow.pop %v1152
    %v1154 = vmul.f32 %v1148, 1.442695
    %v1155 = vpow.pop %v1154
    %v1156 = vmul.f32 %v1149, 1.442695
    %v1157 = vpow.pop %v1156
    %v1158 = vadd.f32 %v1151, 1.0
    %v1159 = vadd.f32 %v1153, 1.0
    %v1160 = vadd.f32 %v1155, 1.0
    %v1161 = vadd.f32 %v1157, 1.0
    %v1162 = vrcp.pop %v1158
    %v1163 = vmul.f32 1.0, %v1162
    %v1164 = vrcp.pop %v1159
    %v1165 = vmul.f32 1.0, %v1164
    %v1166 = vrcp.pop %v1160
    %v1167 = vmul.f32 1.0, %v1166
    %v1168 = vrcp.pop %v1161
    %v1169 = vmul.f32 1.0, %v1168
    %v1170 = vadd.f32 %v1134, %v103
    %v1171 = vadd.f32 %v1139, %v107
    %v1172 = vmul.f32 %v1163, %v1170
    %v1173 = vmul.f32 %v1165, %v1171
    %v1174 = vadd.f32 %v667, %v1172
    %v1175 = vadd.f32 %v668, %v1173
    %v1176 = vtanh.pop %v1174
    %v1177 = vtanh.pop %v1175
    %v1178 = vsub.f32 %v1045, %v1176
    %v1179 = vsub.f32 %v1046, %v1177
    %v1180 = vmul.f32 %v1167, %v1178
    %v1181 = vmul.f32 %v1169, %v1179
    %v1182 = vadd.f32 %v1176, %v1180
    %v1183 = vadd.f32 %v1177, %v1181
    %1184 = vmatprep.subr.mxu0 0.0
    %1185 = vmatpush1.msra.mxu0 0.0
    %1186 = vmatprep.subr.mxu0 0.0
    %1187 = vmatpush1.msra.mxu0 0.0
    %1188 = vmatprep.subr.mxu0 0.0
    %1189 = vmatpush1.msra.mxu0 0.0
    %1190 = vmatprep.subr.mxu0 0.0
    %1191 = vmatpush1.msra.mxu0 0.0
    %1192 = vmatprep.subr.mxu0 0.0
    %1193 = vmatpush1.msra.mxu0 0.0
    %1194 = vmatprep.subr.mxu0 0.0
    %1195 = vmatpush1.msra.mxu0 0.0
    %1196 = vmatprep.subr.mxu0 0.0
    %1197 = vmatpush1.msra.mxu0 0.0
    %1198 = vmatprep.subr.mxu0 0.0
    %1199 = vmatpush1.msra.mxu0 0.0
    %1200 = vmatprep.subr.mxu0 0.0
    %1201 = vmatpush1.msra.mxu0 0.0
    %1202 = vmatprep.subr.mxu0 0.0
    %1203 = vmatpush1.msra.mxu0 0.0
    %1204 = vmatprep.subr.mxu0 0.0
    %1205 = vmatpush1.msra.mxu0 0.0
    %1206 = vmatprep.subr.mxu0 0.0
    %1207 = vmatpush1.msra.mxu0 0.0
    %1208 = vmatprep.subr.mxu0 0.0
    %1209 = vmatpush1.msra.mxu0 0.0
    %1210 = vmatprep.subr.mxu0 0.0
    %1211 = vmatpush1.msra.mxu0 0.0
    %1212 = vmatprep.subr.mxu0 0.0
    %1213 = vmatpush1.msra.mxu0 %v1183
    %1214 = vmatprep.subr.mxu0 0.0
    %1215 = vmatpush1.msra.mxu0 %v1182
    %1216 = vmatprep.subr.mxu0 0.0
    %1217 = vmatpush2.msra.mxu0 0.0
    %1218 = vmatprep.subr.mxu0 0.0
    %1219 = vmatpush2.msra.mxu0 0.0
    %1220 = vmatprep.subr.mxu0 0.0
    %1221 = vmatpush2.msra.mxu0 0.0
    %1222 = vmatprep.subr.mxu0 0.0
    %1223 = vmatpush2.msra.mxu0 0.0
    %1224 = vmatprep.subr.mxu0 0.0
    %1225 = vmatpush2.msra.mxu0 0.0
    %1226 = vmatprep.subr.mxu0 0.0
    %1227 = vmatpush2.msra.mxu0 0.0
    %1228 = vmatprep.subr.mxu0 0.0
    %1229 = vmatpush2.msra.mxu0 0.0
    %1230 = vmatprep.subr.mxu0 0.0
    %1231 = vmatpush2.msra.mxu0 0.0
    %1232 = vmatprep.subr.mxu0 0.0
    %1233 = vmatpush2.msra.mxu0 0.0
    %1234 = vmatprep.subr.mxu0 0.0
    %1235 = vmatpush2.msra.mxu0 0.0
    %1236 = vmatprep.subr.mxu0 0.0
    %1237 = vmatpush2.msra.mxu0 0.0
    %1238 = vmatprep.subr.mxu0 0.0
    %1239 = vmatpush2.msra.mxu0 0.0
    %1240 = vmatprep.subr.mxu0 0.0
    %1241 = vmatpush2.msra.mxu0 0.0
    %1242 = vmatprep.subr.mxu0 0.0
    %1243 = vmatpush2.msra.mxu0 0.0
    %1244 = vmatprep.subr.mxu0 0.0
    %1245 = vmatpush2.msra.mxu0 0.0
    %1246 = vmatprep.subr.mxu0 0.0
    %1247 = vmatpush2.msra.mxu0 0.0
    %1248 = vmatprep.mubr.f32.mxu0 0.0
    %1249 = vmatmul.mubr.f32.gmra.mxu0 %v898
    %v1250 = vpop.f32.mrf.mxu0
    %v1251 = vadd.f32 0.0, %v1250
    %v1252 = vpop.f32.mrf.mxu0
    %1253 = vmatprep.mubr.f32.mxu0 0.0
    %1254 = vmatmul.mubr.f32.gmra.mxu0 %v900
    %v1255 = vpop.f32.mrf.mxu0
    %v1256 = vadd.f32 0.0, %v1255
    %v1257 = vpop.f32.mrf.mxu0
    %1258 = vmatprep.mubr.f32.mxu0 0.0
    %1259 = vmatmul.mubr.f32.gmra.mxu0 %v902
    %v1260 = vpop.f32.mrf.mxu0
    %v1261 = vadd.f32 0.0, %v1260
    %v1262 = vpop.f32.mrf.mxu0
    %1263 = vmatprep.mubr.f32.mxu0 0.0
    %1264 = vmatmul.mubr.f32.gmra.mxu0 %v904
    %v1265 = vpop.f32.mrf.mxu0
    %v1266 = vadd.f32 0.0, %v1265
    %v1267 = vpop.f32.mrf.mxu0
    %1268 = vmatprep.mubr.f32.mxu0 0.0
    %1269 = vmatmul.mubr.f32.gmra.mxu0 %v906
    %v1270 = vpop.f32.mrf.mxu0
    %v1271 = vadd.f32 0.0, %v1270
    %v1272 = vpop.f32.mrf.mxu0
    %1273 = vmatprep.mubr.f32.mxu0 0.0
    %1274 = vmatmul.mubr.f32.gmra.mxu0 %v908
    %v1275 = vpop.f32.mrf.mxu0
    %v1276 = vadd.f32 0.0, %v1275
    %v1277 = vpop.f32.mrf.mxu0
    %1278 = vdwg.mxu0
    %v1279 = vadd.f32 %v844, %v1251
    %v1280 = vadd.f32 %v845, %v1256
    %v1281 = vadd.f32 %v846, %v1261
    %v1282 = vadd.f32 %v847, %v1266
    %v1283 = vxor.u32 %v1279, 2147483648
    %v1284 = vxor.u32 %v1280, 2147483648
    %v1285 = vxor.u32 %v1281, 2147483648
    %v1286 = vxor.u32 %v1282, 2147483648
    %v1287 = vmul.f32 %v1283, 1.442695
    %v1288 = vpow.pop %v1287
    %v1289 = vmul.f32 %v1284, 1.442695
    %v1290 = vpow.pop %v1289
    %v1291 = vmul.f32 %v1285, 1.442695
    %v1292 = vpow.pop %v1291
    %v1293 = vmul.f32 %v1286, 1.442695
    %v1294 = vpow.pop %v1293
    %v1295 = vadd.f32 %v1288, 1.0
    %v1296 = vadd.f32 %v1290, 1.0
    %v1297 = vadd.f32 %v1292, 1.0
    %v1298 = vadd.f32 %v1294, 1.0
    %v1299 = vrcp.pop %v1295
    %v1300 = vmul.f32 1.0, %v1299
    %v1301 = vrcp.pop %v1296
    %v1302 = vmul.f32 1.0, %v1301
    %v1303 = vrcp.pop %v1297
    %v1304 = vmul.f32 1.0, %v1303
    %v1305 = vrcp.pop %v1298
    %v1306 = vmul.f32 1.0, %v1305
    %v1307 = vadd.f32 %v1271, %v103
    %v1308 = vadd.f32 %v1276, %v107
    %v1309 = vmul.f32 %v1300, %v1307
    %v1310 = vmul.f32 %v1302, %v1308
    %v1311 = vadd.f32 %v848, %v1309
    %v1312 = vadd.f32 %v849, %v1310
    %v1313 = vtanh.pop %v1311
    %v1314 = vtanh.pop %v1312
    %v1315 = vsub.f32 %v1182, %v1313
    %v1316 = vsub.f32 %v1183, %v1314
    %v1317 = vmul.f32 %v1304, %v1315
    %v1318 = vmul.f32 %v1306, %v1316
    %v1319 = vadd.f32 %v1313, %v1317
    %v1320 = vadd.f32 %v1314, %v1318
    %1321 = vrot.lane.b32.xlu0 %v40, 102
    %v1322 = vpop.permute.xlu0 %1321
    %v1323 = vsel %vm119, %v1322, 0
    %1325 = vmatprep.subr.mxu0 0.0
    %1326 = vmatpush1.msra.mxu0 0.0
    %1327 = vmatprep.subr.mxu0 0.0
    %1328 = vmatpush1.msra.mxu0 0.0
    %1329 = vmatprep.subr.mxu0 0.0
    %1330 = vmatpush1.msra.mxu0 0.0
    %1331 = vmatprep.subr.mxu0 0.0
    %1332 = vmatpush1.msra.mxu0 0.0
    %1333 = vmatprep.subr.mxu0 0.0
    %1334 = vmatpush1.msra.mxu0 0.0
    %1335 = vmatprep.subr.mxu0 0.0
    %1336 = vmatpush1.msra.mxu0 0.0
    %1337 = vmatprep.subr.mxu0 0.0
    %1338 = vmatpush1.msra.mxu0 0.0
    %1339 = vmatprep.subr.mxu0 0.0
    %1340 = vmatpush1.msra.mxu0 0.0
    %1341 = vmatprep.subr.mxu0 0.0
    %1342 = vmatpush1.msra.mxu0 0.0
    %1343 = vmatprep.subr.mxu0 0.0
    %1344 = vmatpush1.msra.mxu0 0.0
    %1345 = vmatprep.subr.mxu0 0.0
    %1346 = vmatpush1.msra.mxu0 0.0
    %1347 = vmatprep.subr.mxu0 0.0
    %1348 = vmatpush1.msra.mxu0 0.0
    %1349 = vmatprep.subr.mxu0 0.0
    %1350 = vmatpush1.msra.mxu0 0.0
    %1351 = vmatprep.subr.mxu0 0.0
    %1352 = vmatpush1.msra.mxu0 0.0
    %1353 = vmatprep.subr.mxu0 0.0
    %1354 = vmatpush1.msra.mxu0 %v1320
    %1355 = vmatprep.subr.mxu0 0.0
    %1356 = vmatpush1.msra.mxu0 %v1319
    %1357 = vmatprep.subr.mxu0 0.0
    %1358 = vmatpush2.msra.mxu0 0.0
    %1359 = vmatprep.subr.mxu0 0.0
    %1360 = vmatpush2.msra.mxu0 0.0
    %1361 = vmatprep.subr.mxu0 0.0
    %1362 = vmatpush2.msra.mxu0 0.0
    %1363 = vmatprep.subr.mxu0 0.0
    %1364 = vmatpush2.msra.mxu0 0.0
    %1365 = vmatprep.subr.mxu0 0.0
    %1366 = vmatpush2.msra.mxu0 0.0
    %1367 = vmatprep.subr.mxu0 0.0
    %1368 = vmatpush2.msra.mxu0 0.0
    %1369 = vmatprep.subr.mxu0 0.0
    %1370 = vmatpush2.msra.mxu0 0.0
    %1371 = vmatprep.subr.mxu0 0.0
    %1372 = vmatpush2.msra.mxu0 0.0
    %1373 = vmatprep.subr.mxu0 0.0
    %1374 = vmatpush2.msra.mxu0 0.0
    %1375 = vmatprep.subr.mxu0 0.0
    %1376 = vmatpush2.msra.mxu0 0.0
    %1377 = vmatprep.subr.mxu0 0.0
    %1378 = vmatpush2.msra.mxu0 0.0
    %1379 = vmatprep.subr.mxu0 0.0
    %1380 = vmatpush2.msra.mxu0 0.0
    %1381 = vmatprep.subr.mxu0 0.0
    %1382 = vmatpush2.msra.mxu0 0.0
    %1383 = vmatprep.subr.mxu0 0.0
    %1384 = vmatpush2.msra.mxu0 0.0
    %1385 = vmatprep.subr.mxu0 0.0
    %1386 = vmatpush2.msra.mxu0 0.0
    %1387 = vmatprep.subr.mxu0 0.0
    %1388 = vmatpush2.msra.mxu0 0.0
    %1389 = vmatprep.mubr.f32.mxu0 0.0
    %1390 = vmatmul.mubr.f32.gmra.mxu0 %v1323
    %v1391 = vpop.f32.mrf.mxu0
    %v1392 = vadd.f32 0.0, %v1391
    %v1393 = vpop.f32.mrf.mxu0
    %1394 = vdwg.mxu0
    %vm1395 = vcmp.ge.f32.partialorder %v1392, 0.0
    %v1396 = vmul.f32 %v1392, 0.2
    %v1397 = vsel %vm1395, %v1392, %v1396
    %v1398 = vmul.f32 %v1397, 1.442695
    %v1399 = vpow.pop %v1398
    %v1400 = vadd.s32 %v49, 16
    %v1401 = vadd.s32 %v49, 24
    %v1402 = vadd.s32 %v49, 32
    %v1403 = vadd.s32 %v49, 40
    %v1404 = vadd.s32 %v49, 48
    %v1405 = vadd.s32 %v49, 56
    %v1406 = vadd.s32 %v49, 64
    %v1407 = vadd.s32 %v49, 72
    %v1408 = vadd.s32 %v49, 80
    %v1409 = vadd.s32 %v49, 88
    %v1410 = vadd.s32 %v49, 96
    %v1411 = vadd.s32 %v49, 104
    %v1412 = vadd.s32 %v49, 112
    %v1413 = vadd.s32 %v49, 120
    %vm1414 = vcmp.eq.s32.totalorder %v1400, %v672
    %vm1415 = vcmp.eq.s32.totalorder %v1401, %v672
    %vm1416 = vcmp.eq.s32.totalorder %v1402, %v672
    %vm1417 = vcmp.eq.s32.totalorder %v1403, %v672
    %vm1418 = vcmp.eq.s32.totalorder %v1404, %v672
    %vm1419 = vcmp.eq.s32.totalorder %v1405, %v672
    %vm1420 = vcmp.eq.s32.totalorder %v1406, %v672
    %vm1421 = vcmp.eq.s32.totalorder %v1407, %v672
    %vm1422 = vcmp.eq.s32.totalorder %v1408, %v672
    %vm1423 = vcmp.eq.s32.totalorder %v1409, %v672
    %vm1424 = vcmp.eq.s32.totalorder %v1410, %v672
    %vm1425 = vcmp.eq.s32.totalorder %v1411, %v672
    %vm1426 = vcmp.eq.s32.totalorder %v1412, %v672
    %vm1427 = vcmp.eq.s32.totalorder %v1413, %v672
    %v1428 = vsel %vm1414, 1, 0
    %v1429 = vsel %vm1415, 1, 0
    %v1430 = vsel %vm1416, 1, 0
    %v1431 = vsel %vm1417, 1, 0
    %v1432 = vsel %vm1418, 1, 0
    %v1433 = vsel %vm1419, 1, 0
    %v1434 = vsel %vm1420, 1, 0
    %v1435 = vsel %vm1421, 1, 0
    %v1436 = vsel %vm1422, 1, 0
    %v1437 = vsel %vm1423, 1, 0
    %v1438 = vsel %vm1424, 1, 0
    %v1439 = vsel %vm1425, 1, 0
    %v1440 = vsel %vm1426, 1, 0
    %v1441 = vsel %vm1427, 1, 0
    %v1442 = vcvt.s32.f32 %v1428
    %v1443 = vcvt.s32.f32 %v1429
    %v1444 = vcvt.s32.f32 %v1430
    %v1445 = vcvt.s32.f32 %v1431
    %v1446 = vcvt.s32.f32 %v1432
    %v1447 = vcvt.s32.f32 %v1433
    %v1448 = vcvt.s32.f32 %v1434
    %v1449 = vcvt.s32.f32 %v1435
    %v1450 = vcvt.s32.f32 %v1436
    %v1451 = vcvt.s32.f32 %v1437
    %v1452 = vcvt.s32.f32 %v1438
    %v1453 = vcvt.s32.f32 %v1439
    %v1454 = vcvt.s32.f32 %v1440
    %v1455 = vcvt.s32.f32 %v1441
    %1456 = vmatprep.subr.mxu0 0.0
    %1457 = vmatpush1.xpose.msra.mxu0 %v1455
    %1458 = vmatprep.subr.mxu0 0.0
    %1459 = vmatpush1.xpose.msra.mxu0 %v1454
    %1460 = vmatprep.subr.mxu0 0.0
    %1461 = vmatpush1.xpose.msra.mxu0 %v1453
    %1462 = vmatprep.subr.mxu0 0.0
    %1463 = vmatpush1.xpose.msra.mxu0 %v1452
    %1464 = vmatprep.subr.mxu0 0.0
    %1465 = vmatpush1.xpose.msra.mxu0 %v1451
    %1466 = vmatprep.subr.mxu0 0.0
    %1467 = vmatpush1.xpose.msra.mxu0 %v1450
    %1468 = vmatprep.subr.mxu0 0.0
    %1469 = vmatpush1.xpose.msra.mxu0 %v1449
    %1470 = vmatprep.subr.mxu0 0.0
    %1471 = vmatpush1.xpose.msra.mxu0 %v1448
    %1472 = vmatprep.subr.mxu0 0.0
    %1473 = vmatpush1.xpose.msra.mxu0 %v1447
    %1474 = vmatprep.subr.mxu0 0.0
    %1475 = vmatpush1.xpose.msra.mxu0 %v1446
    %1476 = vmatprep.subr.mxu0 0.0
    %1477 = vmatpush1.xpose.msra.mxu0 %v1445
    %1478 = vmatprep.subr.mxu0 0.0
    %1479 = vmatpush1.xpose.msra.mxu0 %v1444
    %1480 = vmatprep.subr.mxu0 0.0
    %1481 = vmatpush1.xpose.msra.mxu0 %v1443
    %1482 = vmatprep.subr.mxu0 0.0
    %1483 = vmatpush1.xpose.msra.mxu0 %v1442
    %1484 = vmatprep.subr.mxu0 0.0
    %1485 = vmatpush1.xpose.msra.mxu0 %v678
    %1486 = vmatprep.subr.mxu0 0.0
    %1487 = vmatpush1.xpose.msra.mxu0 %v677
    %1488 = vmatprep.subr.mxu0 0.0
    %1489 = vmatpush2.xpose.msra.mxu0 0.0
    %1490 = vmatprep.subr.mxu0 0.0
    %1491 = vmatpush2.xpose.msra.mxu0 0.0
    %1492 = vmatprep.subr.mxu0 0.0
    %1493 = vmatpush2.xpose.msra.mxu0 0.0
    %1494 = vmatprep.subr.mxu0 0.0
    %1495 = vmatpush2.xpose.msra.mxu0 0.0
    %1496 = vmatprep.subr.mxu0 0.0
    %1497 = vmatpush2.xpose.msra.mxu0 0.0
    %1498 = vmatprep.subr.mxu0 0.0
    %1499 = vmatpush2.xpose.msra.mxu0 0.0
    %1500 = vmatprep.subr.mxu0 0.0
    %1501 = vmatpush2.xpose.msra.mxu0 0.0
    %1502 = vmatprep.subr.mxu0 0.0
    %1503 = vmatpush2.xpose.msra.mxu0 0.0
    %1504 = vmatprep.subr.mxu0 0.0
    %1505 = vmatpush2.xpose.msra.mxu0 0.0
    %1506 = vmatprep.subr.mxu0 0.0
    %1507 = vmatpush2.xpose.msra.mxu0 0.0
    %1508 = vmatprep.subr.mxu0 0.0
    %1509 = vmatpush2.xpose.msra.mxu0 0.0
    %1510 = vmatprep.subr.mxu0 0.0
    %1511 = vmatpush2.xpose.msra.mxu0 0.0
    %1512 = vmatprep.subr.mxu0 0.0
    %1513 = vmatpush2.xpose.msra.mxu0 0.0
    %1514 = vmatprep.subr.mxu0 0.0
    %1515 = vmatpush2.xpose.msra.mxu0 0.0
    %1516 = vmatprep.subr.mxu0 0.0
    %1517 = vmatpush2.xpose.msra.mxu0 0.0
    %1518 = vmatprep.subr.mxu0 0.0
    %1519 = vmatpush2.xpose.msra.mxu0 0.0
    %1520 = vmatprep.mubr.f32.mxu0 0.0
    %1521 = vmatmul.mubr.f32.gmra.mxu0 %v1399
    %v1522 = vpop.f32.mrf.mxu0
    %v1523 = vadd.f32 0.0, %v1522
    %v1524 = vpop.f32.mrf.mxu0
    %1525 = vdwg.mxu0
    %v1526 = vmax.f32 %v1523, 1e-30
    %v1527 = vrcp.pop %v1526
    %1528 = vmatprep.subr.mxu0 0.0
    %1529 = vmatpush1.msra.mxu0 %v1455
    %1530 = vmatprep.subr.mxu0 0.0
    %1531 = vmatpush1.msra.mxu0 %v1454
    %1532 = vmatprep.subr.mxu0 0.0
    %1533 = vmatpush1.msra.mxu0 %v1453
    %1534 = vmatprep.subr.mxu0 0.0
    %1535 = vmatpush1.msra.mxu0 %v1452
    %1536 = vmatprep.subr.mxu0 0.0
    %1537 = vmatpush1.msra.mxu0 %v1451
    %1538 = vmatprep.subr.mxu0 0.0
    %1539 = vmatpush1.msra.mxu0 %v1450
    %1540 = vmatprep.subr.mxu0 0.0
    %1541 = vmatpush1.msra.mxu0 %v1449
    %1542 = vmatprep.subr.mxu0 0.0
    %1543 = vmatpush1.msra.mxu0 %v1448
    %1544 = vmatprep.subr.mxu0 0.0
    %1545 = vmatpush1.msra.mxu0 %v1447
    %1546 = vmatprep.subr.mxu0 0.0
    %1547 = vmatpush1.msra.mxu0 %v1446
    %1548 = vmatprep.subr.mxu0 0.0
    %1549 = vmatpush1.msra.mxu0 %v1445
    %1550 = vmatprep.subr.mxu0 0.0
    %1551 = vmatpush1.msra.mxu0 %v1444
    %1552 = vmatprep.subr.mxu0 0.0
    %1553 = vmatpush1.msra.mxu0 %v1443
    %1554 = vmatprep.subr.mxu0 0.0
    %1555 = vmatpush1.msra.mxu0 %v1442
    %1556 = vmatprep.subr.mxu0 0.0
    %1557 = vmatpush1.msra.mxu0 %v678
    %1558 = vmatprep.subr.mxu0 0.0
    %1559 = vmatpush1.msra.mxu0 %v677
    %1560 = vmatprep.subr.mxu0 0.0
    %1561 = vmatpush2.msra.mxu0 0.0
    %1562 = vmatprep.subr.mxu0 0.0
    %1563 = vmatpush2.msra.mxu0 0.0
    %1564 = vmatprep.subr.mxu0 0.0
    %1565 = vmatpush2.msra.mxu0 0.0
    %1566 = vmatprep.subr.mxu0 0.0
    %1567 = vmatpush2.msra.mxu0 0.0
    %1568 = vmatprep.subr.mxu0 0.0
    %1569 = vmatpush2.msra.mxu0 0.0
    %1570 = vmatprep.subr.mxu0 0.0
    %1571 = vmatpush2.msra.mxu0 0.0
    %1572 = vmatprep.subr.mxu0 0.0
    %1573 = vmatpush2.msra.mxu0 0.0
    %1574 = vmatprep.subr.mxu0 0.0
    %1575 = vmatpush2.msra.mxu0 0.0
    %1576 = vmatprep.subr.mxu0 0.0
    %1577 = vmatpush2.msra.mxu0 0.0
    %1578 = vmatprep.subr.mxu0 0.0
    %1579 = vmatpush2.msra.mxu0 0.0
    %1580 = vmatprep.subr.mxu0 0.0
    %1581 = vmatpush2.msra.mxu0 0.0
    %1582 = vmatprep.subr.mxu0 0.0
    %1583 = vmatpush2.msra.mxu0 0.0
    %1584 = vmatprep.subr.mxu0 0.0
    %1585 = vmatpush2.msra.mxu0 0.0
    %1586 = vmatprep.subr.mxu0 0.0
    %1587 = vmatpush2.msra.mxu0 0.0
    %1588 = vmatprep.subr.mxu0 0.0
    %1589 = vmatpush2.msra.mxu0 0.0
    %1590 = vmatprep.subr.mxu0 0.0
    %1591 = vmatpush2.msra.mxu0 0.0
    %1592 = vmatprep.mubr.f32.mxu0 0.0
    %1593 = vmatmul.mubr.f32.gmra.mxu0 %v1527
    %v1594 = vpop.f32.mrf.mxu0
    %v1595 = vadd.f32 0.0, %v1594
    %v1596 = vpop.f32.mrf.mxu0
    %1597 = vdwg.mxu0
    %v1598 = vmul.f32 %v1399, %v1595
    %v1599 = vlaneseq
    %v1600 = vshrl.u32 %v1599, 7
    %v1601 = vsub.s32 0, %v1600
    %v1602 = vrot.slane %v1598, %v1601
    %v1603 = vmul.f32 %v1602, %v1319
    %v1604 = vmul.f32 %v1602, %v1320
    %v1605 = vlaneseq
    %v1606 = vshrl.u32 %v1605, 7
    %v1607 = vsub.s32 1, %v1606
    %v1608 = vrot.slane %v1598, %v1607
    %v1609 = vmul.f32 %v1608, %v1319
    %v1610 = vmul.f32 %v1608, %v1320
    %1611 = vmatprep.subr.mxu0 0.0
    %1612 = vmatpush1.xpose.msra.mxu0 %v1455
    %1613 = vmatprep.subr.mxu0 0.0
    %1614 = vmatpush1.xpose.msra.mxu0 %v1454
    %1615 = vmatprep.subr.mxu0 0.0
    %1616 = vmatpush1.xpose.msra.mxu0 %v1453
    %1617 = vmatprep.subr.mxu0 0.0
    %1618 = vmatpush1.xpose.msra.mxu0 %v1452
    %1619 = vmatprep.subr.mxu0 0.0
    %1620 = vmatpush1.xpose.msra.mxu0 %v1451
    %1621 = vmatprep.subr.mxu0 0.0
    %1622 = vmatpush1.xpose.msra.mxu0 %v1450
    %1623 = vmatprep.subr.mxu0 0.0
    %1624 = vmatpush1.xpose.msra.mxu0 %v1449
    %1625 = vmatprep.subr.mxu0 0.0
    %1626 = vmatpush1.xpose.msra.mxu0 %v1448
    %1627 = vmatprep.subr.mxu0 0.0
    %1628 = vmatpush1.xpose.msra.mxu0 %v1447
    %1629 = vmatprep.subr.mxu0 0.0
    %1630 = vmatpush1.xpose.msra.mxu0 %v1446
    %1631 = vmatprep.subr.mxu0 0.0
    %1632 = vmatpush1.xpose.msra.mxu0 %v1445
    %1633 = vmatprep.subr.mxu0 0.0
    %1634 = vmatpush1.xpose.msra.mxu0 %v1444
    %1635 = vmatprep.subr.mxu0 0.0
    %1636 = vmatpush1.xpose.msra.mxu0 %v1443
    %1637 = vmatprep.subr.mxu0 0.0
    %1638 = vmatpush1.xpose.msra.mxu0 %v1442
    %1639 = vmatprep.subr.mxu0 0.0
    %1640 = vmatpush1.xpose.msra.mxu0 %v678
    %1641 = vmatprep.subr.mxu0 0.0
    %1642 = vmatpush1.xpose.msra.mxu0 %v677
    %1643 = vmatprep.subr.mxu0 0.0
    %1644 = vmatpush2.xpose.msra.mxu0 0.0
    %1645 = vmatprep.subr.mxu0 0.0
    %1646 = vmatpush2.xpose.msra.mxu0 0.0
    %1647 = vmatprep.subr.mxu0 0.0
    %1648 = vmatpush2.xpose.msra.mxu0 0.0
    %1649 = vmatprep.subr.mxu0 0.0
    %1650 = vmatpush2.xpose.msra.mxu0 0.0
    %1651 = vmatprep.subr.mxu0 0.0
    %1652 = vmatpush2.xpose.msra.mxu0 0.0
    %1653 = vmatprep.subr.mxu0 0.0
    %1654 = vmatpush2.xpose.msra.mxu0 0.0
    %1655 = vmatprep.subr.mxu0 0.0
    %1656 = vmatpush2.xpose.msra.mxu0 0.0
    %1657 = vmatprep.subr.mxu0 0.0
    %1658 = vmatpush2.xpose.msra.mxu0 0.0
    %1659 = vmatprep.subr.mxu0 0.0
    %1660 = vmatpush2.xpose.msra.mxu0 0.0
    %1661 = vmatprep.subr.mxu0 0.0
    %1662 = vmatpush2.xpose.msra.mxu0 0.0
    %1663 = vmatprep.subr.mxu0 0.0
    %1664 = vmatpush2.xpose.msra.mxu0 0.0
    %1665 = vmatprep.subr.mxu0 0.0
    %1666 = vmatpush2.xpose.msra.mxu0 0.0
    %1667 = vmatprep.subr.mxu0 0.0
    %1668 = vmatpush2.xpose.msra.mxu0 0.0
    %1669 = vmatprep.subr.mxu0 0.0
    %1670 = vmatpush2.xpose.msra.mxu0 0.0
    %1671 = vmatprep.subr.mxu0 0.0
    %1672 = vmatpush2.xpose.msra.mxu0 0.0
    %1673 = vmatprep.subr.mxu0 0.0
    %1674 = vmatpush2.xpose.msra.mxu0 0.0
    %1675 = vmatprep.mubr.f32.mxu0 0.0
    %1676 = vmatmul.mubr.f32.gmra.mxu0 %v1603
    %v1677 = vpop.f32.mrf.mxu0
    %v1678 = vadd.f32 0.0, %v1677
    %v1679 = vpop.f32.mrf.mxu0
    %1680 = vmatprep.mubr.f32.mxu0 0.0
    %1681 = vmatmul.mubr.f32.gmra.mxu0 %v1604
    %v1682 = vpop.f32.mrf.mxu0
    %v1683 = vadd.f32 0.0, %v1682
    %v1684 = vpop.f32.mrf.mxu0
    %1685 = vmatprep.mubr.f32.mxu0 0.0
    %1686 = vmatmul.mubr.f32.gmra.mxu0 %v1609
    %v1687 = vpop.f32.mrf.mxu0
    %v1688 = vadd.f32 0.0, %v1687
    %v1689 = vpop.f32.mrf.mxu0
    %1690 = vmatprep.mubr.f32.mxu0 0.0
    %1691 = vmatmul.mubr.f32.gmra.mxu0 %v1610
    %v1692 = vpop.f32.mrf.mxu0
    %v1693 = vadd.f32 0.0, %v1692
    %v1694 = vpop.f32.mrf.mxu0
    %1695 = vdwg.mxu0
    %1696 = vst [vmem:[%s3] sm:$0xff] %v1678
    %1697 = vst [vmem:[%s3 + $0x8] sm:$0xff] %v1683
    %1698 = vst [vmem:[%s3 + $0x10] sm:$0xff] %v1688
    %1699 = vst [vmem:[%s3 + $0x18] sm:$0xff] %v1693
    // Predicated region
    $region22: #{path_agg_att_forward.1} parent=1 // pred_check
      _
    $region23: #{path_agg_att_forward.1} parent=1 // pred_check_branch
      %1701 = sbr.rel (0) target = $region25
    $region24: #{path_agg_att_forward.1} parent=1 // pred_region
      _
    $region25: #{path_agg_att_forward.1} parent=1 // pred_fallthru
      _
    // Predicated region
    $region26: #{path_agg_att_forward.1} parent=1 // pred_check
      _
    $region27: #{path_agg_att_forward.1} parent=1 // pred_check_branch
      %1703 = sbr.rel (0) target = $region29
    $region28: #{path_agg_att_forward.1} parent=1 // pred_region
      _
    $region29: #{path_agg_att_forward.1} parent=1 // pred_fallthru
      _
    %1704 = vsyncpa [#allocation3], 1
    %1705 = vsyncpa [#allocation5], 1

</llo_original>
